<compile_context>
chip_gen: v7x
topology: tpu7x:2x2x1
jax: 0.10.0
libtpu: 0.0.40
codegen_flags: <defaults>
</compile_context>

<pallas_src>
import jax
import jax.numpy as jnp
from jax.experimental import pallas as pl
from jax.experimental.pallas import tpu as pltpu

# Original model dims (n_input_dim = train_x.shape[1]; small tabular input here).
N_INPUT = 16
N_HIDDEN1 = 400
N_HIDDEN2 = 200
N_OUTPUT = 1
BN_EPS = 1e-5

# TPU-friendly padded dims (feature axes on sublanes, batch on lanes).
H1_PAD = 512
H2_PAD = 256
OUT_PAD = 8          # sublane-aligned output rows; row 0 is the real logit


def churn_kernel(x_ref, w1_ref, b1_ref, w2_ref, b2_ref, w3_ref, b3_ref, o_ref):
    # Feature-major fused MLP tile: bf16 MXU operands, f32 accumulation.
    x = x_ref[...]                                                   # [N_INPUT, tb] bf16

    h1 = jnp.dot(w1_ref[...], x, preferred_element_type=jnp.float32) + b1_ref[...]
    h1 = jnp.maximum(h1, 0.0)                                        # [H1_PAD, tb] f32

    # batchnorm1 (eval) folded into w2/b2 at init.
    h2 = jnp.dot(w2_ref[...], h1.astype(jnp.bfloat16),
                 preferred_element_type=jnp.float32) + b2_ref[...]
    h2 = jnp.maximum(h2, 0.0)                                        # [H2_PAD, tb] f32

    # batchnorm2 (eval) folded into w3/b3; dropout(p=0.1) is identity in eval.
    logits = jnp.dot(w3_ref[...], h2.astype(jnp.bfloat16),
                     preferred_element_type=jnp.float32) + b3_ref[...]   # [OUT_PAD, tb]
    o_ref[...] = jax.nn.sigmoid(logits)


def _round_up(n, m):
    return ((n + m - 1) // m) * m


def churn_forward(x, kp, *, tb=4096):
    """x: [B, N_INPUT] f32, kp: folded+padded kernel params. Returns [B, 1] f32."""
    B = x.shape[0]
    # Effective batch tile: lane-multiple, no larger than needed, and (when the
    # batch allows it) at least 2 tiles so the 'parallel' grid axis shards
    # across both v7x TensorCores.  tb=4096 keeps per-tile VMEM ~20 MiB.
    tb_eff = max(128, min(tb, _round_up(pl.cdiv(B, 2), 128)))
    n_tiles = pl.cdiv(B, tb_eff)
    Bp = n_tiles * tb_eff

    # Pad ragged batch, pre-cast to bf16, go feature-major (batch on lanes).
    xp = jnp.pad(x, ((0, Bp - B), (0, 0))).astype(jnp.bfloat16).T    # [N_INPUT, Bp]

    def const_spec(arr):
        # One block = whole array, constant index -> VMEM-resident, fetched once
        # across all batch tiles (Pallas skips re-DMA for unchanged block idx).
        return pl.BlockSpec(arr.shape, lambda i: (0, 0))

    out_fm = pl.pallas_call(
        churn_kernel,
        out_shape=jax.ShapeDtypeStruct((OUT_PAD, Bp), jnp.float32),
        grid=(n_tiles,),
        in_specs=[
            pl.BlockSpec((N_INPUT, tb_eff), lambda i: (0, i)),
            const_spec(kp["w1"]), const_spec(kp["b1"]),
            const_spec(kp["w2"]), const_spec(kp["b2"]),
            const_spec(kp["w3"]), const_spec(kp["b3"]),
        ],
        out_specs=pl.BlockSpec((OUT_PAD, tb_eff), lambda i: (0, i)),
        compiler_params=pltpu.CompilerParams(
            dimension_semantics=("parallel",),
            vmem_limit_bytes=48 * 1024 * 1024,
        ),
    )(xp, kp["w1"], kp["b1"], kp["w2"], kp["b2"], kp["w3"], kp["b3"])

    return out_fm[:N_OUTPUT, :B].T                                   # [B, 1]


def init_params(key):
    """PyTorch-like init (weights stored [in, out]). BN at fresh-init stats."""
    k1, k2, k3 = jax.random.split(key, 3)

    def linear(k, fan_in, fan_out):
        kw, kb = jax.random.split(k)
        bound = 1.0 / jnp.sqrt(fan_in)
        w = jax.random.uniform(kw, (fan_in, fan_out), jnp.float32, -bound, bound)
        b = jax.random.uniform(kb, (fan_out,), jnp.float32, -bound, bound)
        return w, b

    w1, b1 = linear(k1, N_INPUT, N_HIDDEN1)
    w2, b2 = linear(k2, N_HIDDEN1, N_HIDDEN2)
    w3, b3 = linear(k3, N_HIDDEN2, N_OUTPUT)
    f32 = jnp.float32
    return dict(
        w1=w1, b1=b1, w2=w2, b2=b2, w3=w3, b3=b3,
        g1=jnp.ones((N_HIDDEN1,), f32), beta1=jnp.zeros((N_HIDDEN1,), f32),
        rm1=jnp.zeros((N_HIDDEN1,), f32), rv1=jnp.ones((N_HIDDEN1,), f32),
        g2=jnp.ones((N_HIDDEN2,), f32), beta2=jnp.zeros((N_HIDDEN2,), f32),
        rm2=jnp.zeros((N_HIDDEN2,), f32), rv2=jnp.ones((N_HIDDEN2,), f32),
    )


def fold_and_pad(p):
    """Fold eval-mode BN into the following Linear, transpose to feature-major
    [out_features, in_features], pad to sublane/lane-friendly dims, cast matmul
    weights to bf16 (biases stay f32 shaped [out, 1]). One-time cost at init."""
    s1 = p["g1"] * jax.lax.rsqrt(p["rv1"] + BN_EPS)
    t1 = p["beta1"] - p["rm1"] * s1
    w2f = s1[:, None] * p["w2"]
    b2f = p["b2"] + t1 @ p["w2"]

    s2 = p["g2"] * jax.lax.rsqrt(p["rv2"] + BN_EPS)
    t2 = p["beta2"] - p["rm2"] * s2
    w3f = s2[:, None] * p["w3"]
    b3f = p["b3"] + t2 @ p["w3"]

    def padT(w, rows, cols):
        wt = w.T                                        # [out, in]
        return jnp.pad(wt, ((0, rows - wt.shape[0]), (0, cols - wt.shape[1])))

    def pad_bias(b, rows):
        return jnp.pad(b, (0, rows - b.shape[0])).reshape(rows, 1)

    return dict(
        w1=padT(p["w1"], H1_PAD, N_INPUT).astype(jnp.bfloat16),   # [512, 16]
        b1=pad_bias(p["b1"], H1_PAD),                             # [512, 1]
        w2=padT(w2f, H2_PAD, H1_PAD).astype(jnp.bfloat16),        # [256, 512]
        b2=pad_bias(b2f, H2_PAD),                                 # [256, 1]
        w3=padT(w3f, OUT_PAD, H2_PAD).astype(jnp.bfloat16),       # [8, 256]
        b3=pad_bias(b3f, OUT_PAD),                                # [8, 1]
    )


def reference_forward(x, p):
    """Pure-JAX f32 eval-mode reference (unfolded BN, unpadded, f32 weights)."""
    h1 = jnp.maximum(x @ p["w1"] + p["b1"], 0.0)
    h1 = (h1 - p["rm1"]) * jax.lax.rsqrt(p["rv1"] + BN_EPS) * p["g1"] + p["beta1"]
    h2 = jnp.maximum(h1 @ p["w2"] + p["b2"], 0.0)
    h2 = (h2 - p["rm2"]) * jax.lax.rsqrt(p["rv2"] + BN_EPS) * p["g2"] + p["beta2"]
    # dropout(p=0.1) is identity in eval mode
    return jax.nn.sigmoid(h2 @ p["w3"] + p["b3"])


def reference_kernel_precision(x, kp):
    """Pure-JAX reference mirroring the kernel's arithmetic (bf16 folded weights
    and bf16 activation casts, f32 accumulation) for a tight numeric check."""
    f32 = jnp.float32
    xb = x.astype(jnp.bfloat16).astype(f32)
    h1 = jnp.maximum(xb @ kp["w1"].T.astype(f32) + kp["b1"].T, 0.0)
    h1 = h1.astype(jnp.bfloat16).astype(f32)
    h2 = jnp.maximum(h1 @ kp["w2"].T.astype(f32) + kp["b2"].T, 0.0)
    h2 = h2.astype(jnp.bfloat16).astype(f32)
    logits = h2 @ kp["w3"].T.astype(f32) + kp["b3"].T
    return jax.nn.sigmoid(logits[:, :N_OUTPUT])


if __name__ == "__main__":
    key = jax.random.PRNGKey(0)
    kp_key, kx_key = jax.random.split(key)
    params = init_params(kp_key)
    kparams = fold_and_pad(params)

    # Ragged batch (not a multiple of 128) -> exercises pad + 2-tile grid path.
    B = 200
    x = jax.random.normal(kx_key, (B, N_INPUT), jnp.float32)

    out = churn_forward(x, kparams)          # tb_eff=128, grid of 2 batch tiles
    out = jax.block_until_ready(out)
    assert out.shape == (B, N_OUTPUT)

    # Tight check vs. a reference that mirrors the kernel's bf16/f32 arithmetic.
    ref_kp = reference_kernel_precision(x, kparams)
    err_kp = float(jnp.max(jnp.abs(out - ref_kp)))
    assert err_kp < 2e-3, f"kernel-precision max abs err {err_kp}"

    # Looser check vs. exact f32 eval-mode module semantics (bf16 weight
    # rounding bounds the achievable accuracy here).
    ref = reference_forward(x, params)
    err = float(jnp.max(jnp.abs(out - ref)))
    assert err < 2e-2, f"f32-reference max abs err {err}"

    # TODO(synk): training-mode Dropout randomness / batch-statistic BatchNorm
    # are not reproduced (eval-mode semantics, matching module.eval()); the
    # unused self.conv1 (nn.Conv3d) from __init__ is omitted.

    print("KERNEL_OK")
</pallas_src>

<mosaic_0001>
module attributes {stable_mosaic.version = 11 : i64} {
  func.func @churn_kernel(%arg0: i32, %arg1: memref<16x128xbf16, #tpu.memory_space<vmem>>, %arg2: memref<512x16xbf16, #tpu.memory_space<vmem>>, %arg3: memref<512x1xf32, #tpu.memory_space<vmem>>, %arg4: memref<256x512xbf16, #tpu.memory_space<vmem>>, %arg5: memref<256x1xf32, #tpu.memory_space<vmem>>, %arg6: memref<8x256xbf16, #tpu.memory_space<vmem>>, %arg7: memref<8x1xf32, #tpu.memory_space<vmem>>, %arg8: memref<8x128xf32, #tpu.memory_space<vmem>>) attributes {dimension_semantics = [#tpu.dimension_semantics<parallel>], iteration_bounds = array<i64: 2>, scalar_prefetch = 0 : i64, scratch_operands = 0 : i64, tpu.core_type = #tpu.core_type<tc>, window_params = [{transform_indices = @transform_0, window_bounds = array<i64: 16, 128>}, {pipeline_mode = #tpu.pipeline_mode<synchronous>, transform_indices = @transform_1, window_bounds = array<i64: 512, 16>}, {pipeline_mode = #tpu.pipeline_mode<synchronous>, transform_indices = @transform_2, window_bounds = array<i64: 512, 1>}, {pipeline_mode = #tpu.pipeline_mode<synchronous>, transform_indices = @transform_3, window_bounds = array<i64: 256, 512>}, {pipeline_mode = #tpu.pipeline_mode<synchronous>, transform_indices = @transform_4, window_bounds = array<i64: 256, 1>}, {pipeline_mode = #tpu.pipeline_mode<synchronous>, transform_indices = @transform_5, window_bounds = array<i64: 8, 256>}, {pipeline_mode = #tpu.pipeline_mode<synchronous>, transform_indices = @transform_6, window_bounds = array<i64: 8, 1>}, {transform_indices = @transform_7, window_bounds = array<i64: 8, 128>}]} {
    %c0 = arith.constant 0 : index
    %c0_0 = arith.constant 0 : index
    %0 = vector.load %arg1[%c0, %c0_0] : memref<16x128xbf16, #tpu.memory_space<vmem>>, vector<16x128xbf16>
    %c0_1 = arith.constant 0 : index
    %c0_2 = arith.constant 0 : index
    %1 = vector.load %arg2[%c0_1, %c0_2] : memref<512x16xbf16, #tpu.memory_space<vmem>>, vector<512x16xbf16>
    %cst = arith.constant dense<0.000000e+00> : vector<512x128xf32>
    %2 = tpu.matmul %1, %0, %cst {dimension_numbers = #tpu.dot_dimension_numbers<[1], [0], [0], [1], [0, 0, 1, 1], [], []>} : vector<512x16xbf16>, vector<16x128xbf16>, vector<512x128xf32> -> vector<512x128xf32>
    %c0_3 = arith.constant 0 : index
    %c0_4 = arith.constant 0 : index
    %3 = vector.load %arg3[%c0_3, %c0_4] : memref<512x1xf32, #tpu.memory_space<vmem>>, vector<512x1xf32>
    %4 = vector.broadcast %3 : vector<512x1xf32> to vector<512x128xf32>
    %5 = arith.addf %2, %4 : vector<512x128xf32>
    %cst_5 = arith.constant 0.000000e+00 : f32
    %6 = vector.broadcast %cst_5 : f32 to vector<512x128xf32>
    %7 = arith.maximumf %5, %6 : vector<512x128xf32>
    %c0_6 = arith.constant 0 : index
    %c0_7 = arith.constant 0 : index
    %8 = vector.load %arg4[%c0_6, %c0_7] : memref<256x512xbf16, #tpu.memory_space<vmem>>, vector<256x512xbf16>
    %9 = arith.truncf %7 : vector<512x128xf32> to vector<512x128xbf16>
    %cst_8 = arith.constant dense<0.000000e+00> : vector<256x128xf32>
    %10 = tpu.matmul %8, %9, %cst_8 {dimension_numbers = #tpu.dot_dimension_numbers<[1], [0], [0], [1], [0, 0, 1, 1], [], []>} : vector<256x512xbf16>, vector<512x128xbf16>, vector<256x128xf32> -> vector<256x128xf32>
    %c0_9 = arith.constant 0 : index
    %c0_10 = arith.constant 0 : index
    %11 = vector.load %arg5[%c0_9, %c0_10] : memref<256x1xf32, #tpu.memory_space<vmem>>, vector<256x1xf32>
    %12 = vector.broadcast %11 : vector<256x1xf32> to vector<256x128xf32>
    %13 = arith.addf %10, %12 : vector<256x128xf32>
    %cst_11 = arith.constant 0.000000e+00 : f32
    %14 = vector.broadcast %cst_11 : f32 to vector<256x128xf32>
    %15 = arith.maximumf %13, %14 : vector<256x128xf32>
    %c0_12 = arith.constant 0 : index
    %c0_13 = arith.constant 0 : index
    %16 = vector.load %arg6[%c0_12, %c0_13] : memref<8x256xbf16, #tpu.memory_space<vmem>>, vector<8x256xbf16>
    %17 = arith.truncf %15 : vector<256x128xf32> to vector<256x128xbf16>
    %cst_14 = arith.constant dense<0.000000e+00> : vector<8x128xf32>
    %18 = tpu.matmul %16, %17, %cst_14 {dimension_numbers = #tpu.dot_dimension_numbers<[1], [0], [0], [1], [0, 0, 1, 1], [], []>} : vector<8x256xbf16>, vector<256x128xbf16>, vector<8x128xf32> -> vector<8x128xf32>
    %c0_15 = arith.constant 0 : index
    %c0_16 = arith.constant 0 : index
    %19 = vector.load %arg7[%c0_15, %c0_16] : memref<8x1xf32, #tpu.memory_space<vmem>>, vector<8x1xf32>
    %20 = vector.broadcast %19 : vector<8x1xf32> to vector<8x128xf32>
    %21 = arith.addf %18, %20 : vector<8x128xf32>
    %22 = arith.negf %21 : vector<8x128xf32>
    %23 = math.exp %22 : vector<8x128xf32>
    %cst_17 = arith.constant 1.000000e+00 : f32
    %24 = vector.broadcast %cst_17 : f32 to vector<8x128xf32>
    %25 = arith.addf %24, %23 : vector<8x128xf32>
    %26 = arith.divf %24, %25 : vector<8x128xf32>
    %c0_18 = arith.constant 0 : index
    %c0_19 = arith.constant 0 : index
    %27 = vector.load %arg8[%c0_18, %c0_19] : memref<8x128xf32, #tpu.memory_space<vmem>>, vector<8x128xf32>
    tpu.vector_store %arg8[%c0_18, %c0_19], %26 {strides = array<i32>} : memref<8x128xf32, #tpu.memory_space<vmem>>, vector<8x128xf32>,
    return
  }
  func.func @transform_0(%arg0: i32) -> (i32, i32) {
    %c0_i32 = arith.constant 0 : i32
    %c0_i32_0 = arith.constant 0 : i32
    return %c0_i32, %arg0 : i32, i32
  }
  func.func @transform_1(%arg0: i32) -> (i32, i32) {
    %c0_i32 = arith.constant 0 : i32
    %c0_i32_0 = arith.constant 0 : i32
    %c0_i32_1 = arith.constant 0 : i32
    return %c0_i32, %c0_i32_0 : i32, i32
  }
  func.func @transform_2(%arg0: i32) -> (i32, i32) {
    %c0_i32 = arith.constant 0 : i32
    %c0_i32_0 = arith.constant 0 : i32
    %c0_i32_1 = arith.constant 0 : i32
    return %c0_i32, %c0_i32_0 : i32, i32
  }
  func.func @transform_3(%arg0: i32) -> (i32, i32) {
    %c0_i32 = arith.constant 0 : i32
    %c0_i32_0 = arith.constant 0 : i32
    %c0_i32_1 = arith.constant 0 : i32
    return %c0_i32, %c0_i32_0 : i32, i32
  }
  func.func @transform_4(%arg0: i32) -> (i32, i32) {
    %c0_i32 = arith.constant 0 : i32
    %c0_i32_0 = arith.constant 0 : i32
    %c0_i32_1 = arith.constant 0 : i32
    return %c0_i32, %c0_i32_0 : i32, i32
  }
  func.func @transform_5(%arg0: i32) -> (i32, i32) {
    %c0_i32 = arith.constant 0 : i32
    %c0_i32_0 = arith.constant 0 : i32
    %c0_i32_1 = arith.constant 0 : i32
    return %c0_i32, %c0_i32_0 : i32, i32
  }
  func.func @transform_6(%arg0: i32) -> (i32, i32) {
    %c0_i32 = arith.constant 0 : i32
    %c0_i32_0 = arith.constant 0 : i32
    %c0_i32_1 = arith.constant 0 : i32
    return %c0_i32, %c0_i32_0 : i32, i32
  }
  func.func @transform_7(%arg0: i32) -> (i32, i32) {
    %c0_i32 = arith.constant 0 : i32
    %c0_i32_0 = arith.constant 0 : i32
    return %c0_i32, %arg0 : i32, i32
  }
}

</mosaic_0001>

<llo_original>
// kernel: tpu_custom_call.1
$region0: #{tpu_custom_call.1}
  #allocation0 [shape = 'u32[]', space=smem, size = 0x4, offset = 0x4, fixed_abs, tag = 'smem constant byte address 0x4 - core index']
  #allocation1 [shape = 'u32[144,128]{1,0:T(1,128)}', space=vmem, size = 0x12000, scoped, tag = 'internal scratch']
  %s0 = inlined_call_operand.vmem [shape: bf16[16,256], index: 0, kind: input, shape index: {}]
  %s1 = inlined_call_operand.vmem [shape: bf16[512,16], index: 1, kind: input, shape index: {}]
  %s2 = inlined_call_operand.vmem [shape: f32[512,1], index: 2, kind: input, shape index: {}]
  %s3 = inlined_call_operand.vmem [shape: bf16[256,512], index: 3, kind: input, shape index: {}]
  %s4 = inlined_call_operand.vmem [shape: f32[256,1], index: 4, kind: input, shape index: {}]
  %s5 = inlined_call_operand.vmem [shape: bf16[8,256], index: 5, kind: input, shape index: {}]
  %s6 = inlined_call_operand.vmem [shape: f32[8,1], index: 6, kind: input, shape index: {}]
  %s7 = inlined_call_operand.hbm [shape: f32[8,256], index: 7, kind: output, shape index: {}]
  %s8 = sld [smem:[#allocation0]]
  $region102: #{tpu_custom_call.1} parent=0
    _
  %s10 = ssub.s32 1, %s8
  %s11 = scalar_select 0, %s10, %s8
  $region1: #{tpu_custom_call.1} parent=0
    #allocation2 [shape = 'u8[8192]{0}', space=vmem, size = 0x2000, scoped, tag = 'input window, operand 0']
    #allocation3 [shape = 'u8[8192]{0}', space=vmem, size = 0x2000, scoped, tag = 'output window, operand 0']
    #allocation4 [shape = 's32[2]{0}', space=sflag, size = 0x8, scoped, tag = 'scoped memory for tpu_custom_call.1']
    %12 = vsyncpa [#allocation4], 0
    %s13 = scalar_lea.sflag [#allocation4], 1
    %14 = vsyncpa %s13, 0
    loop: start=0, step=1, limit=4
    $region2: #{tpu_custom_call.1} parent=1 // loop_pre_header
      _
    $region3: #{tpu_custom_call.1} parent=1 // loop_header
      %s16 = sphi 0, %s20
      %p17 = scmp.ge.s32.totalorder %s16, 4
      %s26 = sphi 0, %s28
      %s29 = sphi 0, %s26
      %s30 = sphi 0, %s29
      %s46 = sphi 0, %s30
      %s50 = sphi 0, %s50
      %s52 = sphi 0, %s50
      %s53 = sphi 0, %s52
      %s67 = sphi 0, %s53
      %s71 = sphi 0, %s71
      %s73 = sphi 0, %s71
      %s74 = sphi 0, %s73
      %s88 = sphi 0, %s74
      %s92 = sphi 0, %s92
      %s94 = sphi 0, %s92
      %s95 = sphi 0, %s94
      %s109 = sphi 0, %s95
      %s113 = sphi 0, %s113
      %s115 = sphi 0, %s113
      %s116 = sphi 0, %s115
      %s130 = sphi 0, %s116
      %s134 = sphi 0, %s134
      %s136 = sphi 0, %s134
      %s137 = sphi 0, %s136
      %s151 = sphi 0, %s137
      %s155 = sphi 0, %s155
      %s157 = sphi 0, %s155
      %s158 = sphi 0, %s157
      %s172 = sphi 0, %s158
      %s178 = sphi 0, %s180
      %s181 = sphi 0, %s178
      %s182 = sphi 0, %s181
      %s198 = sphi 0, %s182
    $region4: #{tpu_custom_call.1} parent=1 // loop_header_branch
      %19 = sbr.rel (%p17) target = $region8
    $region5: #{tpu_custom_call.1} parent=1 // loop_body
      %s21 = ssub.s32 %s16, 1
      %s22 = ssub.s32 %s16, 2
      %s23 = sadd.s32 %s16, 1
      %s24 = ssub.s32 %s16, %s23
      %p25 = scmp.eq.s32.totalorder %s24, 0
      %s27 = sadd.s32 %s26, 1
      %s28 = scalar_select %p25, %s26, %s27
      %p31 = pneg %p25
      %p32 = scmp.eq.s32.totalorder %s16, 1
      %p33 = por %p31, %p32
      %p34 = scmp.ne.s32.totalorder %s26, %s29
      %p35 = scmp.eq.s32.totalorder %s16, 0
      %p36 = por %p34, %p35
      %p37 = scmp.ne.s32.totalorder %s26, %s29
      %p38 = scmp.eq.s32.totalorder %s21, 1
      %p39 = por %p37, %p38
      %p40 = scmp.ne.s32.totalorder %s29, %s30
      %p41 = scmp.eq.s32.totalorder %s21, 0
      %p42 = por %p40, %p41
      %p43 = scmp.ne.s32.totalorder %s29, %s30
      %p44 = scmp.eq.s32.totalorder %s22, 1
      %p45 = por %p43, %p44
      %p47 = scmp.ne.s32.totalorder %s30, %s46
      %p48 = scmp.eq.s32.totalorder %s22, 0
      %p49 = por %p47, %p48
      %s51 = sadd.s32 %s50, 1
      %p54 = scmp.eq.s32.totalorder %s16, 1
      %p55 = scmp.ne.s32.totalorder %s50, %s52
      %p56 = scmp.eq.s32.totalorder %s16, 0
      %p57 = por %p55, %p56
      %p58 = scmp.ne.s32.totalorder %s50, %s52
      %p59 = scmp.eq.s32.totalorder %s21, 1
      %p60 = por %p58, %p59
      %p61 = scmp.ne.s32.totalorder %s52, %s53
      %p62 = scmp.eq.s32.totalorder %s21, 0
      %p63 = por %p61, %p62
      %p64 = scmp.ne.s32.totalorder %s52, %s53
      %p65 = scmp.eq.s32.totalorder %s22, 1
      %p66 = por %p64, %p65
      %p68 = scmp.ne.s32.totalorder %s53, %s67
      %p69 = scmp.eq.s32.totalorder %s22, 0
      %p70 = por %p68, %p69
      %s72 = sadd.s32 %s71, 1
      %p75 = scmp.eq.s32.totalorder %s16, 1
      %p76 = scmp.ne.s32.totalorder %s71, %s73
      %p77 = scmp.eq.s32.totalorder %s16, 0
      %p78 = por %p76, %p77
      %p79 = scmp.ne.s32.totalorder %s71, %s73
      %p80 = scmp.eq.s32.totalorder %s21, 1
      %p81 = por %p79, %p80
      %p82 = scmp.ne.s32.totalorder %s73, %s74
      %p83 = scmp.eq.s32.totalorder %s21, 0
      %p84 = por %p82, %p83
      %p85 = scmp.ne.s32.totalorder %s73, %s74
      %p86 = scmp.eq.s32.totalorder %s22, 1
      %p87 = por %p85, %p86
      %p89 = scmp.ne.s32.totalorder %s74, %s88
      %p90 = scmp.eq.s32.totalorder %s22, 0
      %p91 = por %p89, %p90
      %s93 = sadd.s32 %s92, 1
      %p96 = scmp.eq.s32.totalorder %s16, 1
      %p97 = scmp.ne.s32.totalorder %s92, %s94
      %p98 = scmp.eq.s32.totalorder %s16, 0
      %p99 = por %p97, %p98
      %p100 = scmp.ne.s32.totalorder %s92, %s94
      %p101 = scmp.eq.s32.totalorder %s21, 1
      %p102 = por %p100, %p101
      %p103 = scmp.ne.s32.totalorder %s94, %s95
      %p104 = scmp.eq.s32.totalorder %s21, 0
      %p105 = por %p103, %p104
      %p106 = scmp.ne.s32.totalorder %s94, %s95
      %p107 = scmp.eq.s32.totalorder %s22, 1
      %p108 = por %p106, %p107
      %p110 = scmp.ne.s32.totalorder %s95, %s109
      %p111 = scmp.eq.s32.totalorder %s22, 0
      %p112 = por %p110, %p111
      %s114 = sadd.s32 %s113, 1
      %p117 = scmp.eq.s32.totalorder %s16, 1
      %p118 = scmp.ne.s32.totalorder %s113, %s115
      %p119 = scmp.eq.s32.totalorder %s16, 0
      %p120 = por %p118, %p119
      %p121 = scmp.ne.s32.totalorder %s113, %s115
      %p122 = scmp.eq.s32.totalorder %s21, 1
      %p123 = por %p121, %p122
      %p124 = scmp.ne.s32.totalorder %s115, %s116
      %p125 = scmp.eq.s32.totalorder %s21, 0
      %p126 = por %p124, %p125
      %p127 = scmp.ne.s32.totalorder %s115, %s116
      %p128 = scmp.eq.s32.totalorder %s22, 1
      %p129 = por %p127, %p128
      %p131 = scmp.ne.s32.totalorder %s116, %s130
      %p132 = scmp.eq.s32.totalorder %s22, 0
      %p133 = por %p131, %p132
      %s135 = sadd.s32 %s134, 1
      %p138 = scmp.eq.s32.totalorder %s16, 1
      %p139 = scmp.ne.s32.totalorder %s134, %s136
      %p140 = scmp.eq.s32.totalorder %s16, 0
      %p141 = por %p139, %p140
      %p142 = scmp.ne.s32.totalorder %s134, %s136
      %p143 = scmp.eq.s32.totalorder %s21, 1
      %p144 = por %p142, %p143
      %p145 = scmp.ne.s32.totalorder %s136, %s137
      %p146 = scmp.eq.s32.totalorder %s21, 0
      %p147 = por %p145, %p146
      %p148 = scmp.ne.s32.totalorder %s136, %s137
      %p149 = scmp.eq.s32.totalorder %s22, 1
      %p150 = por %p148, %p149
      %p152 = scmp.ne.s32.totalorder %s137, %s151
      %p153 = scmp.eq.s32.totalorder %s22, 0
      %p154 = por %p152, %p153
      %s156 = sadd.s32 %s155, 1
      %p159 = scmp.eq.s32.totalorder %s16, 1
      %p160 = scmp.ne.s32.totalorder %s155, %s157
      %p161 = scmp.eq.s32.totalorder %s16, 0
      %p162 = por %p160, %p161
      %p163 = scmp.ne.s32.totalorder %s155, %s157
      %p164 = scmp.eq.s32.totalorder %s21, 1
      %p165 = por %p163, %p164
      %p166 = scmp.ne.s32.totalorder %s157, %s158
      %p167 = scmp.eq.s32.totalorder %s21, 0
      %p168 = por %p166, %p167
      %p169 = scmp.ne.s32.totalorder %s157, %s158
      %p170 = scmp.eq.s32.totalorder %s22, 1
      %p171 = por %p169, %p170
      %p173 = scmp.ne.s32.totalorder %s158, %s172
      %p174 = scmp.eq.s32.totalorder %s22, 0
      %p175 = por %p173, %p174
      %s176 = ssub.s32 %s16, %s23
      %p177 = scmp.eq.s32.totalorder %s176, 0
      %s179 = sadd.s32 %s178, 1
      %s180 = scalar_select %p177, %s178, %s179
      %p183 = pneg %p177
      %p184 = scmp.eq.s32.totalorder %s16, 1
      %p185 = por %p183, %p184
      %p186 = scmp.ne.s32.totalorder %s178, %s181
      %p187 = scmp.eq.s32.totalorder %s16, 0
      %p188 = por %p186, %p187
      %p189 = scmp.ne.s32.totalorder %s178, %s181
      %p190 = scmp.eq.s32.totalorder %s21, 1
      %p191 = por %p189, %p190
      %p192 = scmp.ne.s32.totalorder %s181, %s182
      %p193 = scmp.eq.s32.totalorder %s21, 0
      %p194 = por %p192, %p193
      %p195 = scmp.ne.s32.totalorder %s181, %s182
      %p196 = scmp.eq.s32.totalorder %s22, 1
      %p197 = por %p195, %p196
      %p199 = scmp.ne.s32.totalorder %s182, %s198
      %p200 = scmp.eq.s32.totalorder %s22, 0
      %p201 = por %p199, %p200
      %p202 = scmp.le.s32.totalorder 1, %s16
      %p203 = scmp.lt.s32.totalorder %s16, 3
      %p204 = pnand %p202, %p203
      %p205 = pneg %p204
      // Predicated region
      $region9: #{tpu_custom_call.1} parent=5 // pred_check
        _
      $region10: #{tpu_custom_call.1} parent=5 // pred_check_branch
        %207 = sbr.rel (%p204) target = $region12
      $region11: #{tpu_custom_call.1} parent=5 // pred_region
        %s208 = ssub.s32 %s16, 1
        // Predicated region
        $region13: #{tpu_custom_call.1} parent=11 // pred_check
          %p209 = pneg %p63
        $region14: #{tpu_custom_call.1} parent=11 // pred_check_branch
          %211 = sbr.rel (%p209) target = $region16
        $region15: #{tpu_custom_call.1} parent=11 // pred_region
          _
        $region16: #{tpu_custom_call.1} parent=11 // pred_fallthru
          _
        // Predicated region
        $region17: #{tpu_custom_call.1} parent=11 // pred_check
          %p212 = pneg %p84
        $region18: #{tpu_custom_call.1} parent=11 // pred_check_branch
          %214 = sbr.rel (%p212) target = $region20
        $region19: #{tpu_custom_call.1} parent=11 // pred_region
          _
        $region20: #{tpu_custom_call.1} parent=11 // pred_fallthru
          _
        // Predicated region
        $region21: #{tpu_custom_call.1} parent=11 // pred_check
          %p215 = pneg %p105
        $region22: #{tpu_custom_call.1} parent=11 // pred_check_branch
          %217 = sbr.rel (%p215) target = $region24
        $region23: #{tpu_custom_call.1} parent=11 // pred_region
          _
        $region24: #{tpu_custom_call.1} parent=11 // pred_fallthru
          _
        // Predicated region
        $region25: #{tpu_custom_call.1} parent=11 // pred_check
          %p218 = pneg %p126
        $region26: #{tpu_custom_call.1} parent=11 // pred_check_branch
          %220 = sbr.rel (%p218) target = $region28
        $region27: #{tpu_custom_call.1} parent=11 // pred_region
          _
        $region28: #{tpu_custom_call.1} parent=11 // pred_fallthru
          _
        // Predicated region
        $region29: #{tpu_custom_call.1} parent=11 // pred_check
          %p221 = pneg %p147
        $region30: #{tpu_custom_call.1} parent=11 // pred_check_branch
          %223 = sbr.rel (%p221) target = $region32
        $region31: #{tpu_custom_call.1} parent=11 // pred_region
          _
        $region32: #{tpu_custom_call.1} parent=11 // pred_fallthru
          _
        // Predicated region
        $region33: #{tpu_custom_call.1} parent=11 // pred_check
          %p224 = pneg %p168
        $region34: #{tpu_custom_call.1} parent=11 // pred_check_branch
          %226 = sbr.rel (%p224) target = $region36
        $region35: #{tpu_custom_call.1} parent=11 // pred_region
          _
        $region36: #{tpu_custom_call.1} parent=11 // pred_fallthru
          _
      $region12: #{tpu_custom_call.1} parent=5 // pred_fallthru
        _
      %p227 = scmp.lt.s32.totalorder %s16, 2
      // Predicated region
      $region37: #{tpu_custom_call.1} parent=5 // pred_check
        %p228 = pneg %p227
      $region38: #{tpu_custom_call.1} parent=5 // pred_check_branch
        %230 = sbr.rel (%p228) target = $region40
      $region39: #{tpu_custom_call.1} parent=5 // pred_region
        // Predicated region
        $region41: #{tpu_custom_call.1} parent=39 // pred_check
          %p231 = pneg %p36
        $region42: #{tpu_custom_call.1} parent=39 // pred_check_branch
          %233 = sbr.rel (%p231) target = $region44
        $region43: #{tpu_custom_call.1} parent=39 // pred_region
          %s234 = sand.u32 %s26, 1
          %s235 = sand.u32 %s26, 1
          %s236 = smul.addr %s235, 8
          %s237 = scalar_lea.vmem [#allocation2], %s236
          %s238 = smul.addr %s16, 4
          %s239 = scalar_lea.vmem %s0, %s238
          // Predicated region
          $region45: #{tpu_custom_call.1} parent=43 // pred_check
            _
          $region46: #{tpu_custom_call.1} parent=43 // pred_check_branch
            %241 = sbr.rel (0) target = $region48
          $region47: #{tpu_custom_call.1} parent=43 // pred_region
            // Predicated region
            $region49: #{tpu_custom_call.1} parent=47 // pred_check
              _
            $region50: #{tpu_custom_call.1} parent=47 // pred_check_branch
              %243 = sbr.rel target = $region52
            $region51: #{tpu_custom_call.1} parent=47 // pred_region
              // Predicated region
              $region64: #{tpu_custom_call.1} parent=51 // pred_check
                _
              $region65: #{tpu_custom_call.1} parent=51 // pred_check_branch
                %260 = sbr.rel (0) target = $region67
              $region66: #{tpu_custom_call.1} parent=51 // pred_region
                loop: start=0, step=1, limit=1
                $region68: #{tpu_custom_call.1} parent=66 // loop_pre_header
                  _
                $region69: #{tpu_custom_call.1} parent=66 // loop_header
                  %s262 = sphi 0, %s266
                  %p263 = scmp.ge.s32.totalorder %s262, 1
                  %s267 = sphi %s239, %s239
                  %s268 = sphi %s237, %s237
                $region70: #{tpu_custom_call.1} parent=66 // loop_header_branch
                  %265 = sbr.rel (%p263) target = $region74
                $region71: #{tpu_custom_call.1} parent=66 // loop_body
                  _
                $region72: #{tpu_custom_call.1} parent=66 // loop_footer
                  %s266 = sadd.s32 1, %s262
                $region73: #{tpu_custom_call.1} parent=66 // loop_footer_branch
                  %261 = sbr.rel target = $region69
                $region74: #{tpu_custom_call.1} parent=66 // loop_exit
                  _
                loop: start=0, step=1, limit=1
                $region75: #{tpu_custom_call.1} parent=66 // loop_pre_header
                  _
                $region76: #{tpu_custom_call.1} parent=66 // loop_header
                  %s271 = sphi 0, %s275
                  %p272 = scmp.ge.s32.totalorder %s271, 1
                  %s276 = sphi %s239, %s239
                  %s277 = sphi %s237, %s237
                $region77: #{tpu_custom_call.1} parent=66 // loop_header_branch
                  %274 = sbr.rel (%p272) target = $region81
                $region78: #{tpu_custom_call.1} parent=66 // loop_body
                  %v278 = vld [vmem:[%s276] sm:$0xf]
                  %279 = vst [vmem:[%s277] sm:$0xf] %v278
                  %v280 = vld [vmem:[%s276 + $0x8] sm:$0xf]
                  %281 = vst [vmem:[%s277 + $0x4] sm:$0xf] %v280
                $region79: #{tpu_custom_call.1} parent=66 // loop_footer
                  %s275 = sadd.s32 1, %s271
                $region80: #{tpu_custom_call.1} parent=66 // loop_footer_branch
                  %270 = sbr.rel target = $region76
                $region81: #{tpu_custom_call.1} parent=66 // loop_exit
                  _
              $region67: #{tpu_custom_call.1} parent=51 // pred_fallthru
                _
            $region52: #{tpu_custom_call.1} parent=47 // pred_fallthru
              _
            // Predicated region
            $region53: #{tpu_custom_call.1} parent=47 // pred_check
              _
            $region54: #{tpu_custom_call.1} parent=47 // pred_check_branch
              %245 = sbr.rel (0) target = $region56
            $region55: #{tpu_custom_call.1} parent=47 // pred_region
              loop: start=0, step=1, limit=1
              $region57: #{tpu_custom_call.1} parent=55 // loop_pre_header
                _
              $region58: #{tpu_custom_call.1} parent=55 // loop_header
                %s248 = sphi 0, %s252
                %p249 = scmp.ge.s32.totalorder %s248, 1
                %s253 = sphi %s239, %s239
                %s254 = sphi %s237, %s237
              $region59: #{tpu_custom_call.1} parent=55 // loop_header_branch
                %251 = sbr.rel (%p249) target = $region63
              $region60: #{tpu_custom_call.1} parent=55 // loop_body
                %v255 = vld [vmem:[%s253] sm:$0xf]
                %256 = vst [vmem:[%s254] sm:$0xf] %v255
                %v257 = vld [vmem:[%s253 + $0x8] sm:$0xf]
                %258 = vst [vmem:[%s254 + $0x4] sm:$0xf] %v257
              $region61: #{tpu_custom_call.1} parent=55 // loop_footer
                %s252 = sadd.s32 1, %s248
              $region62: #{tpu_custom_call.1} parent=55 // loop_footer_branch
                %247 = sbr.rel target = $region58
              $region63: #{tpu_custom_call.1} parent=55 // loop_exit
                _
            $region56: #{tpu_custom_call.1} parent=47 // pred_fallthru
              _
          $region48: #{tpu_custom_call.1} parent=43 // pred_fallthru
            _
          %282 = vnop
        $region44: #{tpu_custom_call.1} parent=39 // pred_fallthru
          _
      $region40: #{tpu_custom_call.1} parent=5 // pred_fallthru
        _
      %p283 = scmp.le.s32.totalorder 1, %s16
      %p284 = scmp.lt.s32.totalorder %s16, 3
      %p285 = pnand %p283, %p284
      %p286 = pneg %p285
      // Predicated region
      $region82: #{tpu_custom_call.1} parent=5 // pred_check
        _
      $region83: #{tpu_custom_call.1} parent=5 // pred_check_branch
        %288 = sbr.rel (%p285) target = $region85
      $region84: #{tpu_custom_call.1} parent=5 // pred_region
        %s289 = ssub.s32 %s16, 1
        %s290 = sand.u32 %s29, 1
        %s291 = sand.u32 %s29, 1
        %s292 = smul.addr %s291, 8
        %s293 = scalar_lea.vmem [#allocation2], %s292
        // Predicated region
        $region86: #{tpu_custom_call.1} parent=84 // pred_check
          %p294 = pneg %p42
        $region87: #{tpu_custom_call.1} parent=84 // pred_check_branch
          %296 = sbr.rel (%p294) target = $region89
        $region88: #{tpu_custom_call.1} parent=84 // pred_region
          _
        $region89: #{tpu_custom_call.1} parent=84 // pred_fallthru
          _
        %s297 = sand.u32 %s29, 1
        %s298 = sand.u32 %s29, 1
        %s299 = smul.addr %s298, 8
        %s300 = scalar_lea.vmem [#allocation2], %s299
        %p301 = pneg %p42
        %p302 = pneg %p39
        %p303 = pneg %p63
        %p304 = pneg %p60
        %p305 = pneg %p84
        %p306 = pneg %p81
        %p307 = pneg %p105
        %p308 = pneg %p102
        %p309 = pneg %p126
        %p310 = pneg %p123
        %p311 = pneg %p147
        %p312 = pneg %p144
        %p313 = pneg %p168
        %p314 = pneg %p165
        %p315 = pneg %p194
        %p316 = pneg %p191
        %s317 = sand.u32 %s181, 1
        %s318 = scalar_lea.sflag [#allocation4], %s317
        %s319 = sand.u32 %s181, 1
        %s320 = smul.addr %s319, 8
        %s321 = scalar_lea.vmem [#allocation3], %s320
        %v323 = vld [vmem:[%s293] sm:$0xf]
        %v324 = vld [vmem:[%s293 + $0x4] sm:$0xf]
        %v325 = vld [vmem:[%s1] sm:$0xf]
        %v326 = vld [vmem:[%s1 + $0x4] sm:$0xf]
        %v327 = vld [vmem:[%s1 + $0x8] sm:$0xf]
        %v328 = vld [vmem:[%s1 + $0xc] sm:$0xf]
        %v329 = vld [vmem:[%s1 + $0x10] sm:$0xf]
        %v330 = vld [vmem:[%s1 + $0x14] sm:$0xf]
        %v331 = vld [vmem:[%s1 + $0x18] sm:$0xf]
        %v332 = vld [vmem:[%s1 + $0x1c] sm:$0xf]
        %v333 = vld [vmem:[%s1 + $0x20] sm:$0xf]
        %v334 = vld [vmem:[%s1 + $0x24] sm:$0xf]
        %v335 = vld [vmem:[%s1 + $0x28] sm:$0xf]
        %v336 = vld [vmem:[%s1 + $0x2c] sm:$0xf]
        %v337 = vld [vmem:[%s1 + $0x30] sm:$0xf]
        %v338 = vld [vmem:[%s1 + $0x34] sm:$0xf]
        %v339 = vld [vmem:[%s1 + $0x38] sm:$0xf]
        %v340 = vld [vmem:[%s1 + $0x3c] sm:$0xf]
        %v341 = vld [vmem:[%s1 + $0x40] sm:$0xf]
        %v342 = vld [vmem:[%s1 + $0x44] sm:$0xf]
        %v343 = vld [vmem:[%s1 + $0x48] sm:$0xf]
        %v344 = vld [vmem:[%s1 + $0x4c] sm:$0xf]
        %v345 = vld [vmem:[%s1 + $0x50] sm:$0xf]
        %v346 = vld [vmem:[%s1 + $0x54] sm:$0xf]
        %v347 = vld [vmem:[%s1 + $0x58] sm:$0xf]
        %v348 = vld [vmem:[%s1 + $0x5c] sm:$0xf]
        %v349 = vld [vmem:[%s1 + $0x60] sm:$0xf]
        %v350 = vld [vmem:[%s1 + $0x64] sm:$0xf]
        %v351 = vld [vmem:[%s1 + $0x68] sm:$0xf]
        %v352 = vld [vmem:[%s1 + $0x6c] sm:$0xf]
        %v353 = vld [vmem:[%s1 + $0x70] sm:$0xf]
        %v354 = vld [vmem:[%s1 + $0x74] sm:$0xf]
        %v355 = vld [vmem:[%s1 + $0x78] sm:$0xf]
        %v356 = vld [vmem:[%s1 + $0x7c] sm:$0xf]
        %v357 = vld [vmem:[%s1 + $0x80] sm:$0xf]
        %v358 = vld [vmem:[%s1 + $0x84] sm:$0xf]
        %v359 = vld [vmem:[%s1 + $0x88] sm:$0xf]
        %v360 = vld [vmem:[%s1 + $0x8c] sm:$0xf]
        %v361 = vld [vmem:[%s1 + $0x90] sm:$0xf]
        %v362 = vld [vmem:[%s1 + $0x94] sm:$0xf]
        %v363 = vld [vmem:[%s1 + $0x98] sm:$0xf]
        %v364 = vld [vmem:[%s1 + $0x9c] sm:$0xf]
        %v365 = vld [vmem:[%s1 + $0xa0] sm:$0xf]
        %v366 = vld [vmem:[%s1 + $0xa4] sm:$0xf]
        %v367 = vld [vmem:[%s1 + $0xa8] sm:$0xf]
        %v368 = vld [vmem:[%s1 + $0xac] sm:$0xf]
        %v369 = vld [vmem:[%s1 + $0xb0] sm:$0xf]
        %v370 = vld [vmem:[%s1 + $0xb4] sm:$0xf]
        %v371 = vld [vmem:[%s1 + $0xb8] sm:$0xf]
        %v372 = vld [vmem:[%s1 + $0xbc] sm:$0xf]
        %v373 = vld [vmem:[%s1 + $0xc0] sm:$0xf]
        %v374 = vld [vmem:[%s1 + $0xc4] sm:$0xf]
        %v375 = vld [vmem:[%s1 + $0xc8] sm:$0xf]
        %v376 = vld [vmem:[%s1 + $0xcc] sm:$0xf]
        %v377 = vld [vmem:[%s1 + $0xd0] sm:$0xf]
        %v378 = vld [vmem:[%s1 + $0xd4] sm:$0xf]
        %v379 = vld [vmem:[%s1 + $0xd8] sm:$0xf]
        %v380 = vld [vmem:[%s1 + $0xdc] sm:$0xf]
        %v381 = vld [vmem:[%s1 + $0xe0] sm:$0xf]
        %v382 = vld [vmem:[%s1 + $0xe4] sm:$0xf]
        %v383 = vld [vmem:[%s1 + $0xe8] sm:$0xf]
        %v384 = vld [vmem:[%s1 + $0xec] sm:$0xf]
        %v385 = vld [vmem:[%s1 + $0xf0] sm:$0xf]
        %v386 = vld [vmem:[%s1 + $0xf4] sm:$0xf]
        %v387 = vld [vmem:[%s1 + $0xf8] sm:$0xf]
        %v388 = vld [vmem:[%s1 + $0xfc] sm:$0xf]
        %v389 = vld [vmem:[%s2] sm:$0xff]
        %v390 = vld [vmem:[%s2 + $0x8] sm:$0xff]
        %v391 = vld [vmem:[%s2 + $0x10] sm:$0xff]
        %v392 = vld [vmem:[%s2 + $0x18] sm:$0xff]
        %v393 = vld [vmem:[%s2 + $0x20] sm:$0xff]
        %v394 = vld [vmem:[%s2 + $0x28] sm:$0xff]
        %v395 = vld [vmem:[%s2 + $0x30] sm:$0xff]
        %v396 = vld [vmem:[%s2 + $0x38] sm:$0xff]
        %v397 = vld [vmem:[%s2 + $0x40] sm:$0xff]
        %v398 = vld [vmem:[%s2 + $0x48] sm:$0xff]
        %v399 = vld [vmem:[%s2 + $0x50] sm:$0xff]
        %v400 = vld [vmem:[%s2 + $0x58] sm:$0xff]
        %v401 = vld [vmem:[%s2 + $0x60] sm:$0xff]
        %v402 = vld [vmem:[%s2 + $0x68] sm:$0xff]
        %v403 = vld [vmem:[%s2 + $0x70] sm:$0xff]
        %v404 = vld [vmem:[%s2 + $0x78] sm:$0xff]
        %v405 = vld [vmem:[%s2 + $0x80] sm:$0xff]
        %v406 = vld [vmem:[%s2 + $0x88] sm:$0xff]
        %v407 = vld [vmem:[%s2 + $0x90] sm:$0xff]
        %v408 = vld [vmem:[%s2 + $0x98] sm:$0xff]
        %v409 = vld [vmem:[%s2 + $0xa0] sm:$0xff]
        %v410 = vld [vmem:[%s2 + $0xa8] sm:$0xff]
        %v411 = vld [vmem:[%s2 + $0xb0] sm:$0xff]
        %v412 = vld [vmem:[%s2 + $0xb8] sm:$0xff]
        %v413 = vld [vmem:[%s2 + $0xc0] sm:$0xff]
        %v414 = vld [vmem:[%s2 + $0xc8] sm:$0xff]
        %v415 = vld [vmem:[%s2 + $0xd0] sm:$0xff]
        %v416 = vld [vmem:[%s2 + $0xd8] sm:$0xff]
        %v417 = vld [vmem:[%s2 + $0xe0] sm:$0xff]
        %v418 = vld [vmem:[%s2 + $0xe8] sm:$0xff]
        %v419 = vld [vmem:[%s2 + $0xf0] sm:$0xff]
        %v420 = vld [vmem:[%s2 + $0xf8] sm:$0xff]
        %v421 = vld [vmem:[%s2 + $0x100] sm:$0xff]
        %v422 = vld [vmem:[%s2 + $0x108] sm:$0xff]
        %v423 = vld [vmem:[%s2 + $0x110] sm:$0xff]
        %v424 = vld [vmem:[%s2 + $0x118] sm:$0xff]
        %v425 = vld [vmem:[%s2 + $0x120] sm:$0xff]
        %v426 = vld [vmem:[%s2 + $0x128] sm:$0xff]
        %v427 = vld [vmem:[%s2 + $0x130] sm:$0xff]
        %v428 = vld [vmem:[%s2 + $0x138] sm:$0xff]
        %v429 = vld [vmem:[%s2 + $0x140] sm:$0xff]
        %v430 = vld [vmem:[%s2 + $0x148] sm:$0xff]
        %v431 = vld [vmem:[%s2 + $0x150] sm:$0xff]
        %v432 = vld [vmem:[%s2 + $0x158] sm:$0xff]
        %v433 = vld [vmem:[%s2 + $0x160] sm:$0xff]
        %v434 = vld [vmem:[%s2 + $0x168] sm:$0xff]
        %v435 = vld [vmem:[%s2 + $0x170] sm:$0xff]
        %v436 = vld [vmem:[%s2 + $0x178] sm:$0xff]
        %v437 = vld [vmem:[%s2 + $0x180] sm:$0xff]
        %v438 = vld [vmem:[%s2 + $0x188] sm:$0xff]
        %v439 = vld [vmem:[%s2 + $0x190] sm:$0xff]
        %v440 = vld [vmem:[%s2 + $0x198] sm:$0xff]
        %v441 = vld [vmem:[%s2 + $0x1a0] sm:$0xff]
        %v442 = vld [vmem:[%s2 + $0x1a8] sm:$0xff]
        %v443 = vld [vmem:[%s2 + $0x1b0] sm:$0xff]
        %v444 = vld [vmem:[%s2 + $0x1b8] sm:$0xff]
        %v445 = vld [vmem:[%s2 + $0x1c0] sm:$0xff]
        %v446 = vld [vmem:[%s2 + $0x1c8] sm:$0xff]
        %v447 = vld [vmem:[%s2 + $0x1d0] sm:$0xff]
        %v448 = vld [vmem:[%s2 + $0x1d8] sm:$0xff]
        %v449 = vld [vmem:[%s2 + $0x1e0] sm:$0xff]
        %v450 = vld [vmem:[%s2 + $0x1e8] sm:$0xff]
        %v451 = vld [vmem:[%s2 + $0x1f0] sm:$0xff]
        %v452 = vld [vmem:[%s2 + $0x1f8] sm:$0xff]
        %454 = vset.pattern.permute.xlu0 0
        %455 = vperm.xlu0 %454, %v389
        %v456 = vpop.permute.xlu0 %455
        %459 = vset.pattern.permute.xlu0 0
        %460 = vperm.xlu0 %459, %v390
        %v461 = vpop.permute.xlu0 %460
        %464 = vset.pattern.permute.xlu0 0
        %465 = vperm.xlu0 %464, %v391
        %v466 = vpop.permute.xlu0 %465
        %469 = vset.pattern.permute.xlu0 0
        %470 = vperm.xlu0 %469, %v392
        %v471 = vpop.permute.xlu0 %470
        %474 = vset.pattern.permute.xlu0 0
        %475 = vperm.xlu0 %474, %v393
        %v476 = vpop.permute.xlu0 %475
        %479 = vset.pattern.permute.xlu0 0
        %480 = vperm.xlu0 %479, %v394
        %v481 = vpop.permute.xlu0 %480
        %484 = vset.pattern.permute.xlu0 0
        %485 = vperm.xlu0 %484, %v395
        %v486 = vpop.permute.xlu0 %485
        %489 = vset.pattern.permute.xlu0 0
        %490 = vperm.xlu0 %489, %v396
        %v491 = vpop.permute.xlu0 %490
        %494 = vset.pattern.permute.xlu0 0
        %495 = vperm.xlu0 %494, %v397
        %v496 = vpop.permute.xlu0 %495
        %499 = vset.pattern.permute.xlu0 0
        %500 = vperm.xlu0 %499, %v398
        %v501 = vpop.permute.xlu0 %500
        %504 = vset.pattern.permute.xlu0 0
        %505 = vperm.xlu0 %504, %v399
        %v506 = vpop.permute.xlu0 %505
        %509 = vset.pattern.permute.xlu0 0
        %510 = vperm.xlu0 %509, %v400
        %v511 = vpop.permute.xlu0 %510
        %514 = vset.pattern.permute.xlu0 0
        %515 = vperm.xlu0 %514, %v401
        %v516 = vpop.permute.xlu0 %515
        %519 = vset.pattern.permute.xlu0 0
        %520 = vperm.xlu0 %519, %v402
        %v521 = vpop.permute.xlu0 %520
        %524 = vset.pattern.permute.xlu0 0
        %525 = vperm.xlu0 %524, %v403
        %v526 = vpop.permute.xlu0 %525
        %529 = vset.pattern.permute.xlu0 0
        %530 = vperm.xlu0 %529, %v404
        %v531 = vpop.permute.xlu0 %530
        %534 = vset.pattern.permute.xlu0 0
        %535 = vperm.xlu0 %534, %v405
        %v536 = vpop.permute.xlu0 %535
        %539 = vset.pattern.permute.xlu0 0
        %540 = vperm.xlu0 %539, %v406
        %v541 = vpop.permute.xlu0 %540
        %544 = vset.pattern.permute.xlu0 0
        %545 = vperm.xlu0 %544, %v407
        %v546 = vpop.permute.xlu0 %545
        %549 = vset.pattern.permute.xlu0 0
        %550 = vperm.xlu0 %549, %v408
        %v551 = vpop.permute.xlu0 %550
        %554 = vset.pattern.permute.xlu0 0
        %555 = vperm.xlu0 %554, %v409
        %v556 = vpop.permute.xlu0 %555
        %559 = vset.pattern.permute.xlu0 0
        %560 = vperm.xlu0 %559, %v410
        %v561 = vpop.permute.xlu0 %560
        %564 = vset.pattern.permute.xlu0 0
        %565 = vperm.xlu0 %564, %v411
        %v566 = vpop.permute.xlu0 %565
        %569 = vset.pattern.permute.xlu0 0
        %570 = vperm.xlu0 %569, %v412
        %v571 = vpop.permute.xlu0 %570
        %574 = vset.pattern.permute.xlu0 0
        %575 = vperm.xlu0 %574, %v413
        %v576 = vpop.permute.xlu0 %575
        %579 = vset.pattern.permute.xlu0 0
        %580 = vperm.xlu0 %579, %v414
        %v581 = vpop.permute.xlu0 %580
        %584 = vset.pattern.permute.xlu0 0
        %585 = vperm.xlu0 %584, %v415
        %v586 = vpop.permute.xlu0 %585
        %589 = vset.pattern.permute.xlu0 0
        %590 = vperm.xlu0 %589, %v416
        %v591 = vpop.permute.xlu0 %590
        %594 = vset.pattern.permute.xlu0 0
        %595 = vperm.xlu0 %594, %v417
        %v596 = vpop.permute.xlu0 %595
        %599 = vset.pattern.permute.xlu0 0
        %600 = vperm.xlu0 %599, %v418
        %v601 = vpop.permute.xlu0 %600
        %604 = vset.pattern.permute.xlu0 0
        %605 = vperm.xlu0 %604, %v419
        %v606 = vpop.permute.xlu0 %605
        %609 = vset.pattern.permute.xlu0 0
        %610 = vperm.xlu0 %609, %v420
        %v611 = vpop.permute.xlu0 %610
        %614 = vset.pattern.permute.xlu0 0
        %615 = vperm.xlu0 %614, %v421
        %v616 = vpop.permute.xlu0 %615
        %619 = vset.pattern.permute.xlu0 0
        %620 = vperm.xlu0 %619, %v422
        %v621 = vpop.permute.xlu0 %620
        %624 = vset.pattern.permute.xlu0 0
        %625 = vperm.xlu0 %624, %v423
        %v626 = vpop.permute.xlu0 %625
        %629 = vset.pattern.permute.xlu0 0
        %630 = vperm.xlu0 %629, %v424
        %v631 = vpop.permute.xlu0 %630
        %634 = vset.pattern.permute.xlu0 0
        %635 = vperm.xlu0 %634, %v425
        %v636 = vpop.permute.xlu0 %635
        %639 = vset.pattern.permute.xlu0 0
        %640 = vperm.xlu0 %639, %v426
        %v641 = vpop.permute.xlu0 %640
        %644 = vset.pattern.permute.xlu0 0
        %645 = vperm.xlu0 %644, %v427
        %v646 = vpop.permute.xlu0 %645
        %649 = vset.pattern.permute.xlu0 0
        %650 = vperm.xlu0 %649, %v428
        %v651 = vpop.permute.xlu0 %650
        %654 = vset.pattern.permute.xlu0 0
        %655 = vperm.xlu0 %654, %v429
        %v656 = vpop.permute.xlu0 %655
        %659 = vset.pattern.permute.xlu0 0
        %660 = vperm.xlu0 %659, %v430
        %v661 = vpop.permute.xlu0 %660
        %664 = vset.pattern.permute.xlu0 0
        %665 = vperm.xlu0 %664, %v431
        %v666 = vpop.permute.xlu0 %665
        %669 = vset.pattern.permute.xlu0 0
        %670 = vperm.xlu0 %669, %v432
        %v671 = vpop.permute.xlu0 %670
        %674 = vset.pattern.permute.xlu0 0
        %675 = vperm.xlu0 %674, %v433
        %v676 = vpop.permute.xlu0 %675
        %679 = vset.pattern.permute.xlu0 0
        %680 = vperm.xlu0 %679, %v434
        %v681 = vpop.permute.xlu0 %680
        %684 = vset.pattern.permute.xlu0 0
        %685 = vperm.xlu0 %684, %v435
        %v686 = vpop.permute.xlu0 %685
        %689 = vset.pattern.permute.xlu0 0
        %690 = vperm.xlu0 %689, %v436
        %v691 = vpop.permute.xlu0 %690
        %694 = vset.pattern.permute.xlu0 0
        %695 = vperm.xlu0 %694, %v437
        %v696 = vpop.permute.xlu0 %695
        %699 = vset.pattern.permute.xlu0 0
        %700 = vperm.xlu0 %699, %v438
        %v701 = vpop.permute.xlu0 %700
        %704 = vset.pattern.permute.xlu0 0
        %705 = vperm.xlu0 %704, %v439
        %v706 = vpop.permute.xlu0 %705
        %709 = vset.pattern.permute.xlu0 0
        %710 = vperm.xlu0 %709, %v440
        %v711 = vpop.permute.xlu0 %710
        %714 = vset.pattern.permute.xlu0 0
        %715 = vperm.xlu0 %714, %v441
        %v716 = vpop.permute.xlu0 %715
        %719 = vset.pattern.permute.xlu0 0
        %720 = vperm.xlu0 %719, %v442
        %v721 = vpop.permute.xlu0 %720
        %724 = vset.pattern.permute.xlu0 0
        %725 = vperm.xlu0 %724, %v443
        %v726 = vpop.permute.xlu0 %725
        %729 = vset.pattern.permute.xlu0 0
        %730 = vperm.xlu0 %729, %v444
        %v731 = vpop.permute.xlu0 %730
        %734 = vset.pattern.permute.xlu0 0
        %735 = vperm.xlu0 %734, %v445
        %v736 = vpop.permute.xlu0 %735
        %739 = vset.pattern.permute.xlu0 0
        %740 = vperm.xlu0 %739, %v446
        %v741 = vpop.permute.xlu0 %740
        %744 = vset.pattern.permute.xlu0 0
        %745 = vperm.xlu0 %744, %v447
        %v746 = vpop.permute.xlu0 %745
        %749 = vset.pattern.permute.xlu0 0
        %750 = vperm.xlu0 %749, %v448
        %v751 = vpop.permute.xlu0 %750
        %754 = vset.pattern.permute.xlu0 0
        %755 = vperm.xlu0 %754, %v449
        %v756 = vpop.permute.xlu0 %755
        %759 = vset.pattern.permute.xlu0 0
        %760 = vperm.xlu0 %759, %v450
        %v761 = vpop.permute.xlu0 %760
        %764 = vset.pattern.permute.xlu0 0
        %765 = vperm.xlu0 %764, %v451
        %v766 = vpop.permute.xlu0 %765
        %769 = vset.pattern.permute.xlu0 0
        %770 = vperm.xlu0 %769, %v452
        %v771 = vpop.permute.xlu0 %770
        %v837 = vunpack.c.l.b16 %v325
        %v838 = vunpack.c.l.b16 %v326
        %v839 = vunpack.c.l.b16 %v327
        %v840 = vunpack.c.l.b16 %v328
        %v841 = vunpack.c.l.b16 %v329
        %v842 = vunpack.c.l.b16 %v330
        %v843 = vunpack.c.l.b16 %v331
        %v844 = vunpack.c.l.b16 %v332
        %v845 = vunpack.c.l.b16 %v333
        %v846 = vunpack.c.l.b16 %v334
        %v847 = vunpack.c.l.b16 %v335
        %v848 = vunpack.c.l.b16 %v336
        %v849 = vunpack.c.l.b16 %v337
        %v850 = vunpack.c.l.b16 %v338
        %v851 = vunpack.c.l.b16 %v339
        %v852 = vunpack.c.l.b16 %v340
        %v853 = vunpack.c.l.b16 %v341
        %v854 = vunpack.c.l.b16 %v342
        %v855 = vunpack.c.l.b16 %v343
        %v856 = vunpack.c.l.b16 %v344
        %v857 = vunpack.c.l.b16 %v345
        %v858 = vunpack.c.l.b16 %v346
        %v859 = vunpack.c.l.b16 %v347
        %v860 = vunpack.c.l.b16 %v348
        %v861 = vunpack.c.l.b16 %v349
        %v862 = vunpack.c.l.b16 %v350
        %v863 = vunpack.c.l.b16 %v351
        %v864 = vunpack.c.l.b16 %v352
        %v865 = vunpack.c.l.b16 %v353
        %v866 = vunpack.c.l.b16 %v354
        %v867 = vunpack.c.l.b16 %v355
        %v868 = vunpack.c.l.b16 %v356
        %v869 = vunpack.c.l.b16 %v357
        %v870 = vunpack.c.l.b16 %v358
        %v871 = vunpack.c.l.b16 %v359
        %v872 = vunpack.c.l.b16 %v360
        %v873 = vunpack.c.l.b16 %v361
        %v874 = vunpack.c.l.b16 %v362
        %v875 = vunpack.c.l.b16 %v363
        %v876 = vunpack.c.l.b16 %v364
        %v877 = vunpack.c.l.b16 %v365
        %v878 = vunpack.c.l.b16 %v366
        %v879 = vunpack.c.l.b16 %v367
        %v880 = vunpack.c.l.b16 %v368
        %v881 = vunpack.c.l.b16 %v369
        %v882 = vunpack.c.l.b16 %v370
        %v883 = vunpack.c.l.b16 %v371
        %v884 = vunpack.c.l.b16 %v372
        %v885 = vunpack.c.l.b16 %v373
        %v886 = vunpack.c.l.b16 %v374
        %v887 = vunpack.c.l.b16 %v375
        %v888 = vunpack.c.l.b16 %v376
        %v889 = vunpack.c.l.b16 %v377
        %v890 = vunpack.c.l.b16 %v378
        %v891 = vunpack.c.l.b16 %v379
        %v892 = vunpack.c.l.b16 %v380
        %v893 = vunpack.c.l.b16 %v381
        %v894 = vunpack.c.l.b16 %v382
        %v895 = vunpack.c.l.b16 %v383
        %v896 = vunpack.c.l.b16 %v384
        %v897 = vunpack.c.l.b16 %v385
        %v898 = vunpack.c.l.b16 %v386
        %v899 = vunpack.c.l.b16 %v387
        %v900 = vunpack.c.l.b16 %v388
        %v901 = vpack.c.b16 %v838, %v837
        %v902 = vpack.c.b16 %v840, %v839
        %v903 = vpack.c.b16 %v842, %v841
        %v904 = vpack.c.b16 %v844, %v843
        %v905 = vpack.c.b16 %v846, %v845
        %v906 = vpack.c.b16 %v848, %v847
        %v907 = vpack.c.b16 %v850, %v849
        %v908 = vpack.c.b16 %v852, %v851
        %v909 = vpack.c.b16 %v854, %v853
        %v910 = vpack.c.b16 %v856, %v855
        %v911 = vpack.c.b16 %v858, %v857
        %v912 = vpack.c.b16 %v860, %v859
        %v913 = vpack.c.b16 %v862, %v861
        %v914 = vpack.c.b16 %v864, %v863
        %v915 = vpack.c.b16 %v866, %v865
        %v916 = vpack.c.b16 %v868, %v867
        %v917 = vpack.c.b16 %v870, %v869
        %v918 = vpack.c.b16 %v872, %v871
        %v919 = vpack.c.b16 %v874, %v873
        %v920 = vpack.c.b16 %v876, %v875
        %v921 = vpack.c.b16 %v878, %v877
        %v922 = vpack.c.b16 %v880, %v879
        %v923 = vpack.c.b16 %v882, %v881
        %v924 = vpack.c.b16 %v884, %v883
        %v925 = vpack.c.b16 %v886, %v885
        %v926 = vpack.c.b16 %v888, %v887
        %v927 = vpack.c.b16 %v890, %v889
        %v928 = vpack.c.b16 %v892, %v891
        %v929 = vpack.c.b16 %v894, %v893
        %v930 = vpack.c.b16 %v896, %v895
        %v931 = vpack.c.b16 %v898, %v897
        %v932 = vpack.c.b16 %v900, %v899
        %v935 = vunpack.c.l.b16 %v323
        %v936 = vunpack.c.l.b16 %v324
        %v937 = vpack.c.b16 %v936, %v935
        %vm939 = vcmask 130048
        %v941 = vsel %vm939, %v901, 0
        %v944 = vsel %vm939, %v902, 0
        %v947 = vsel %vm939, %v903, 0
        %v950 = vsel %vm939, %v904, 0
        %v953 = vsel %vm939, %v905, 0
        %v956 = vsel %vm939, %v906, 0
        %v959 = vsel %vm939, %v907, 0
        %v962 = vsel %vm939, %v908, 0
        %v965 = vsel %vm939, %v909, 0
        %v968 = vsel %vm939, %v910, 0
        %v971 = vsel %vm939, %v911, 0
        %v974 = vsel %vm939, %v912, 0
        %v977 = vsel %vm939, %v913, 0
        %v980 = vsel %vm939, %v914, 0
        %v983 = vsel %vm939, %v915, 0
        %v986 = vsel %vm939, %v916, 0
        %v989 = vsel %vm939, %v917, 0
        %v992 = vsel %vm939, %v918, 0
        %v995 = vsel %vm939, %v919, 0
        %v998 = vsel %vm939, %v920, 0
        %v1001 = vsel %vm939, %v921, 0
        %v1004 = vsel %vm939, %v922, 0
        %v1007 = vsel %vm939, %v923, 0
        %v1010 = vsel %vm939, %v924, 0
        %v1013 = vsel %vm939, %v925, 0
        %v1016 = vsel %vm939, %v926, 0
        %v1019 = vsel %vm939, %v927, 0
        %v1022 = vsel %vm939, %v928, 0
        %v1025 = vsel %vm939, %v929, 0
        %v1028 = vsel %vm939, %v930, 0
        %v1031 = vsel %vm939, %v931, 0
        %v1034 = vsel %vm939, %v932, 0
        %1036 = vmatprep.subr.bf16.mxu0 0
        %1037 = vmatpush1.bf16.msra.mxu0 %v937
        %1038 = vmatprep.subr.bf16.mxu0 0
        %1039 = vmatpush1.bf16.msra.mxu0 0
        %1040 = vmatprep.subr.bf16.mxu0 0
        %1041 = vmatpush1.bf16.msra.mxu0 0
        %1042 = vmatprep.subr.bf16.mxu0 0
        %1043 = vmatpush1.bf16.msra.mxu0 0
        %1044 = vmatprep.subr.bf16.mxu0 0
        %1045 = vmatpush1.bf16.msra.mxu0 0
        %1046 = vmatprep.subr.bf16.mxu0 0
        %1047 = vmatpush1.bf16.msra.mxu0 0
        %1048 = vmatprep.subr.bf16.mxu0 0
        %1049 = vmatpush1.bf16.msra.mxu0 0
        %1050 = vmatprep.subr.bf16.mxu0 0
        %1051 = vmatpush1.bf16.msra.mxu0 0
        %1052 = vmatprep.subr.bf16.mxu0 0
        %1053 = vmatpush1.bf16.msra.mxu0 0
        %1054 = vmatprep.subr.bf16.mxu0 0
        %1055 = vmatpush1.bf16.msra.mxu0 0
        %1056 = vmatprep.subr.bf16.mxu0 0
        %1057 = vmatpush1.bf16.msra.mxu0 0
        %1058 = vmatprep.subr.bf16.mxu0 0
        %1059 = vmatpush1.bf16.msra.mxu0 0
        %1060 = vmatprep.subr.bf16.mxu0 0
        %1061 = vmatpush1.bf16.msra.mxu0 0
        %1062 = vmatprep.subr.bf16.mxu0 0
        %1063 = vmatpush1.bf16.msra.mxu0 0
        %1064 = vmatprep.subr.bf16.mxu0 0
        %1065 = vmatpush1.bf16.msra.mxu0 0
        %1066 = vmatprep.subr.bf16.mxu0 0
        %1067 = vmatpush1.bf16.msra.mxu0 0
        %1068 = vmatprep.mubr.bf16.mxu0 0
        %1069 = vmatmul.mubr.bf16.gmra.mrb[0].mxu0 %v941
        %v1070 = vpop.f32.mrb[0].mxu0
        %v1071 = vadd.f32 %v456, %v1070
        %v1072 = vpop.f32.mrb[0].mxu0
        %v1073 = vpop.f32.mrb[0].mxu0
        %v1074 = vadd.f32 %v461, %v1073
        %v1075 = vpop.f32.mrb[0].mxu0
        %1076 = vmatprep.mubr.bf16.mxu0 0
        %1077 = vmatmul.mubr.bf16.gmra.mrb[0].mxu0 %v944
        %v1078 = vpop.f32.mrb[0].mxu0
        %v1079 = vadd.f32 %v466, %v1078
        %v1080 = vpop.f32.mrb[0].mxu0
        %v1081 = vpop.f32.mrb[0].mxu0
        %v1082 = vadd.f32 %v471, %v1081
        %v1083 = vpop.f32.mrb[0].mxu0
        %1084 = vmatprep.mubr.bf16.mxu0 0
        %1085 = vmatmul.mubr.bf16.gmra.mrb[0].mxu0 %v947
        %v1086 = vpop.f32.mrb[0].mxu0
        %v1087 = vadd.f32 %v476, %v1086
        %v1088 = vpop.f32.mrb[0].mxu0
        %v1089 = vpop.f32.mrb[0].mxu0
        %v1090 = vadd.f32 %v481, %v1089
        %v1091 = vpop.f32.mrb[0].mxu0
        %1092 = vmatprep.mubr.bf16.mxu0 0
        %1093 = vmatmul.mubr.bf16.gmra.mrb[0].mxu0 %v950
        %v1094 = vpop.f32.mrb[0].mxu0
        %v1095 = vadd.f32 %v486, %v1094
        %v1096 = vpop.f32.mrb[0].mxu0
        %v1097 = vpop.f32.mrb[0].mxu0
        %v1098 = vadd.f32 %v491, %v1097
        %v1099 = vpop.f32.mrb[0].mxu0
        %1100 = vmatprep.mubr.bf16.mxu0 0
        %1101 = vmatmul.mubr.bf16.gmra.mrb[0].mxu0 %v953
        %v1102 = vpop.f32.mrb[0].mxu0
        %v1103 = vadd.f32 %v496, %v1102
        %v1104 = vpop.f32.mrb[0].mxu0
        %v1105 = vpop.f32.mrb[0].mxu0
        %v1106 = vadd.f32 %v501, %v1105
        %v1107 = vpop.f32.mrb[0].mxu0
        %1108 = vmatprep.mubr.bf16.mxu0 0
        %1109 = vmatmul.mubr.bf16.gmra.mrb[0].mxu0 %v956
        %v1110 = vpop.f32.mrb[0].mxu0
        %v1111 = vadd.f32 %v506, %v1110
        %v1112 = vpop.f32.mrb[0].mxu0
        %v1113 = vpop.f32.mrb[0].mxu0
        %v1114 = vadd.f32 %v511, %v1113
        %v1115 = vpop.f32.mrb[0].mxu0
        %1116 = vmatprep.mubr.bf16.mxu0 0
        %1117 = vmatmul.mubr.bf16.gmra.mrb[0].mxu0 %v959
        %v1118 = vpop.f32.mrb[0].mxu0
        %v1119 = vadd.f32 %v516, %v1118
        %v1120 = vpop.f32.mrb[0].mxu0
        %v1121 = vpop.f32.mrb[0].mxu0
        %v1122 = vadd.f32 %v521, %v1121
        %v1123 = vpop.f32.mrb[0].mxu0
        %1124 = vmatprep.mubr.bf16.mxu0 0
        %1125 = vmatmul.mubr.bf16.gmra.mrb[0].mxu0 %v962
        %v1126 = vpop.f32.mrb[0].mxu0
        %v1127 = vadd.f32 %v526, %v1126
        %v1128 = vpop.f32.mrb[0].mxu0
        %v1129 = vpop.f32.mrb[0].mxu0
        %v1130 = vadd.f32 %v531, %v1129
        %v1131 = vpop.f32.mrb[0].mxu0
        %1132 = vmatprep.mubr.bf16.mxu0 0
        %1133 = vmatmul.mubr.bf16.gmra.mrb[0].mxu0 %v965
        %v1134 = vpop.f32.mrb[0].mxu0
        %v1135 = vadd.f32 %v536, %v1134
        %v1136 = vpop.f32.mrb[0].mxu0
        %v1137 = vpop.f32.mrb[0].mxu0
        %v1138 = vadd.f32 %v541, %v1137
        %v1139 = vpop.f32.mrb[0].mxu0
        %1140 = vmatprep.mubr.bf16.mxu0 0
        %1141 = vmatmul.mubr.bf16.gmra.mrb[0].mxu0 %v968
        %v1142 = vpop.f32.mrb[0].mxu0
        %v1143 = vadd.f32 %v546, %v1142
        %v1144 = vpop.f32.mrb[0].mxu0
        %v1145 = vpop.f32.mrb[0].mxu0
        %v1146 = vadd.f32 %v551, %v1145
        %v1147 = vpop.f32.mrb[0].mxu0
        %1148 = vmatprep.mubr.bf16.mxu0 0
        %1149 = vmatmul.mubr.bf16.gmra.mrb[0].mxu0 %v971
        %v1150 = vpop.f32.mrb[0].mxu0
        %v1151 = vadd.f32 %v556, %v1150
        %v1152 = vpop.f32.mrb[0].mxu0
        %v1153 = vpop.f32.mrb[0].mxu0
        %v1154 = vadd.f32 %v561, %v1153
        %v1155 = vpop.f32.mrb[0].mxu0
        %1156 = vmatprep.mubr.bf16.mxu0 0
        %1157 = vmatmul.mubr.bf16.gmra.mrb[0].mxu0 %v974
        %v1158 = vpop.f32.mrb[0].mxu0
        %v1159 = vadd.f32 %v566, %v1158
        %v1160 = vpop.f32.mrb[0].mxu0
        %v1161 = vpop.f32.mrb[0].mxu0
        %v1162 = vadd.f32 %v571, %v1161
        %v1163 = vpop.f32.mrb[0].mxu0
        %1164 = vmatprep.mubr.bf16.mxu0 0
        %1165 = vmatmul.mubr.bf16.gmra.mrb[0].mxu0 %v977
        %v1166 = vpop.f32.mrb[0].mxu0
        %v1167 = vadd.f32 %v576, %v1166
        %v1168 = vpop.f32.mrb[0].mxu0
        %v1169 = vpop.f32.mrb[0].mxu0
        %v1170 = vadd.f32 %v581, %v1169
        %v1171 = vpop.f32.mrb[0].mxu0
        %1172 = vmatprep.mubr.bf16.mxu0 0
        %1173 = vmatmul.mubr.bf16.gmra.mrb[0].mxu0 %v980
        %v1174 = vpop.f32.mrb[0].mxu0
        %v1175 = vadd.f32 %v586, %v1174
        %v1176 = vpop.f32.mrb[0].mxu0
        %v1177 = vpop.f32.mrb[0].mxu0
        %v1178 = vadd.f32 %v591, %v1177
        %v1179 = vpop.f32.mrb[0].mxu0
        %1180 = vmatprep.mubr.bf16.mxu0 0
        %1181 = vmatmul.mubr.bf16.gmra.mrb[0].mxu0 %v983
        %v1182 = vpop.f32.mrb[0].mxu0
        %v1183 = vadd.f32 %v596, %v1182
        %v1184 = vpop.f32.mrb[0].mxu0
        %v1185 = vpop.f32.mrb[0].mxu0
        %v1186 = vadd.f32 %v601, %v1185
        %v1187 = vpop.f32.mrb[0].mxu0
        %1188 = vmatprep.mubr.bf16.mxu0 0
        %1189 = vmatmul.mubr.bf16.gmra.mrb[0].mxu0 %v986
        %v1190 = vpop.f32.mrb[0].mxu0
        %v1191 = vadd.f32 %v606, %v1190
        %v1192 = vpop.f32.mrb[0].mxu0
        %v1193 = vpop.f32.mrb[0].mxu0
        %v1194 = vadd.f32 %v611, %v1193
        %v1195 = vpop.f32.mrb[0].mxu0
        %1196 = vmatprep.mubr.bf16.mxu0 0
        %1197 = vmatmul.mubr.bf16.gmra.mrb[0].mxu0 %v989
        %v1198 = vpop.f32.mrb[0].mxu0
        %v1199 = vadd.f32 %v616, %v1198
        %v1200 = vpop.f32.mrb[0].mxu0
        %v1201 = vpop.f32.mrb[0].mxu0
        %v1202 = vadd.f32 %v621, %v1201
        %v1203 = vpop.f32.mrb[0].mxu0
        %1204 = vmatprep.mubr.bf16.mxu0 0
        %1205 = vmatmul.mubr.bf16.gmra.mrb[0].mxu0 %v992
        %v1206 = vpop.f32.mrb[0].mxu0
        %v1207 = vadd.f32 %v626, %v1206
        %v1208 = vpop.f32.mrb[0].mxu0
        %v1209 = vpop.f32.mrb[0].mxu0
        %v1210 = vadd.f32 %v631, %v1209
        %v1211 = vpop.f32.mrb[0].mxu0
        %1212 = vmatprep.mubr.bf16.mxu0 0
        %1213 = vmatmul.mubr.bf16.gmra.mrb[0].mxu0 %v995
        %v1214 = vpop.f32.mrb[0].mxu0
        %v1215 = vadd.f32 %v636, %v1214
        %v1216 = vpop.f32.mrb[0].mxu0
        %v1217 = vpop.f32.mrb[0].mxu0
        %v1218 = vadd.f32 %v641, %v1217
        %v1219 = vpop.f32.mrb[0].mxu0
        %1220 = vmatprep.mubr.bf16.mxu0 0
        %1221 = vmatmul.mubr.bf16.gmra.mrb[0].mxu0 %v998
        %v1222 = vpop.f32.mrb[0].mxu0
        %v1223 = vadd.f32 %v646, %v1222
        %v1224 = vpop.f32.mrb[0].mxu0
        %v1225 = vpop.f32.mrb[0].mxu0
        %v1226 = vadd.f32 %v651, %v1225
        %v1227 = vpop.f32.mrb[0].mxu0
        %1228 = vmatprep.mubr.bf16.mxu0 0
        %1229 = vmatmul.mubr.bf16.gmra.mrb[0].mxu0 %v1001
        %v1230 = vpop.f32.mrb[0].mxu0
        %v1231 = vadd.f32 %v656, %v1230
        %v1232 = vpop.f32.mrb[0].mxu0
        %v1233 = vpop.f32.mrb[0].mxu0
        %v1234 = vadd.f32 %v661, %v1233
        %v1235 = vpop.f32.mrb[0].mxu0
        %1236 = vmatprep.mubr.bf16.mxu0 0
        %1237 = vmatmul.mubr.bf16.gmra.mrb[0].mxu0 %v1004
        %v1238 = vpop.f32.mrb[0].mxu0
        %v1239 = vadd.f32 %v666, %v1238
        %v1240 = vpop.f32.mrb[0].mxu0
        %v1241 = vpop.f32.mrb[0].mxu0
        %v1242 = vadd.f32 %v671, %v1241
        %v1243 = vpop.f32.mrb[0].mxu0
        %1244 = vmatprep.mubr.bf16.mxu0 0
        %1245 = vmatmul.mubr.bf16.gmra.mrb[0].mxu0 %v1007
        %v1246 = vpop.f32.mrb[0].mxu0
        %v1247 = vadd.f32 %v676, %v1246
        %v1248 = vpop.f32.mrb[0].mxu0
        %v1249 = vpop.f32.mrb[0].mxu0
        %v1250 = vadd.f32 %v681, %v1249
        %v1251 = vpop.f32.mrb[0].mxu0
        %1252 = vmatprep.mubr.bf16.mxu0 0
        %1253 = vmatmul.mubr.bf16.gmra.mrb[0].mxu0 %v1010
        %v1254 = vpop.f32.mrb[0].mxu0
        %v1255 = vadd.f32 %v686, %v1254
        %v1256 = vpop.f32.mrb[0].mxu0
        %v1257 = vpop.f32.mrb[0].mxu0
        %v1258 = vadd.f32 %v691, %v1257
        %v1259 = vpop.f32.mrb[0].mxu0
        %1260 = vmatprep.mubr.bf16.mxu0 0
        %1261 = vmatmul.mubr.bf16.gmra.mrb[0].mxu0 %v1013
        %v1262 = vpop.f32.mrb[0].mxu0
        %v1263 = vadd.f32 %v696, %v1262
        %v1264 = vpop.f32.mrb[0].mxu0
        %v1265 = vpop.f32.mrb[0].mxu0
        %v1266 = vadd.f32 %v701, %v1265
        %v1267 = vpop.f32.mrb[0].mxu0
        %1268 = vmatprep.mubr.bf16.mxu0 0
        %1269 = vmatmul.mubr.bf16.gmra.mrb[0].mxu0 %v1016
        %v1270 = vpop.f32.mrb[0].mxu0
        %v1271 = vadd.f32 %v706, %v1270
        %v1272 = vpop.f32.mrb[0].mxu0
        %v1273 = vpop.f32.mrb[0].mxu0
        %v1274 = vadd.f32 %v711, %v1273
        %v1275 = vpop.f32.mrb[0].mxu0
        %1276 = vmatprep.mubr.bf16.mxu0 0
        %1277 = vmatmul.mubr.bf16.gmra.mrb[0].mxu0 %v1019
        %v1278 = vpop.f32.mrb[0].mxu0
        %v1279 = vadd.f32 %v716, %v1278
        %v1280 = vpop.f32.mrb[0].mxu0
        %v1281 = vpop.f32.mrb[0].mxu0
        %v1282 = vadd.f32 %v721, %v1281
        %v1283 = vpop.f32.mrb[0].mxu0
        %1284 = vmatprep.mubr.bf16.mxu0 0
        %1285 = vmatmul.mubr.bf16.gmra.mrb[0].mxu0 %v1022
        %v1286 = vpop.f32.mrb[0].mxu0
        %v1287 = vadd.f32 %v726, %v1286
        %v1288 = vpop.f32.mrb[0].mxu0
        %v1289 = vpop.f32.mrb[0].mxu0
        %v1290 = vadd.f32 %v731, %v1289
        %v1291 = vpop.f32.mrb[0].mxu0
        %1292 = vmatprep.mubr.bf16.mxu0 0
        %1293 = vmatmul.mubr.bf16.gmra.mrb[0].mxu0 %v1025
        %v1294 = vpop.f32.mrb[0].mxu0
        %v1295 = vadd.f32 %v736, %v1294
        %v1296 = vpop.f32.mrb[0].mxu0
        %v1297 = vpop.f32.mrb[0].mxu0
        %v1298 = vadd.f32 %v741, %v1297
        %v1299 = vpop.f32.mrb[0].mxu0
        %1300 = vmatprep.mubr.bf16.mxu0 0
        %1301 = vmatmul.mubr.bf16.gmra.mrb[0].mxu0 %v1028
        %v1302 = vpop.f32.mrb[0].mxu0
        %v1303 = vadd.f32 %v746, %v1302
        %v1304 = vpop.f32.mrb[0].mxu0
        %v1305 = vpop.f32.mrb[0].mxu0
        %v1306 = vadd.f32 %v751, %v1305
        %v1307 = vpop.f32.mrb[0].mxu0
        %1308 = vmatprep.mubr.bf16.mxu0 0
        %1309 = vmatmul.mubr.bf16.gmra.mrb[0].mxu0 %v1031
        %v1310 = vpop.f32.mrb[0].mxu0
        %v1311 = vadd.f32 %v756, %v1310
        %v1312 = vpop.f32.mrb[0].mxu0
        %v1313 = vpop.f32.mrb[0].mxu0
        %v1314 = vadd.f32 %v761, %v1313
        %v1315 = vpop.f32.mrb[0].mxu0
        %1316 = vmatprep.mubr.bf16.mxu0 0
        %1317 = vmatmul.mubr.bf16.gmra.mrb[0].mxu0 %v1034
        %v1318 = vpop.f32.mrb[0].mxu0
        %v1319 = vadd.f32 %v766, %v1318
        %v1320 = vpop.f32.mrb[0].mxu0
        %v1321 = vpop.f32.mrb[0].mxu0
        %v1322 = vadd.f32 %v771, %v1321
        %v1323 = vpop.f32.mrb[0].mxu0
        %1324 = vdwg.mxu0
        %v1325 = vmax.f32 %v1071, 0.0
        %v1326 = vmax.f32 %v1074, 0.0
        %v1327 = vmax.f32 %v1079, 0.0
        %v1328 = vmax.f32 %v1082, 0.0
        %v1329 = vmax.f32 %v1087, 0.0
        %v1330 = vmax.f32 %v1090, 0.0
        %v1331 = vmax.f32 %v1095, 0.0
        %v1332 = vmax.f32 %v1098, 0.0
        %v1333 = vmax.f32 %v1103, 0.0
        %v1334 = vmax.f32 %v1106, 0.0
        %v1335 = vmax.f32 %v1111, 0.0
        %v1336 = vmax.f32 %v1114, 0.0
        %v1337 = vmax.f32 %v1119, 0.0
        %v1338 = vmax.f32 %v1122, 0.0
        %v1339 = vmax.f32 %v1127, 0.0
        %v1340 = vmax.f32 %v1130, 0.0
        %v1341 = vmax.f32 %v1135, 0.0
        %v1342 = vmax.f32 %v1138, 0.0
        %v1343 = vmax.f32 %v1143, 0.0
        %v1344 = vmax.f32 %v1146, 0.0
        %v1345 = vmax.f32 %v1151, 0.0
        %v1346 = vmax.f32 %v1154, 0.0
        %v1347 = vmax.f32 %v1159, 0.0
        %v1348 = vmax.f32 %v1162, 0.0
        %v1349 = vmax.f32 %v1167, 0.0
        %v1350 = vmax.f32 %v1170, 0.0
        %v1351 = vmax.f32 %v1175, 0.0
        %v1352 = vmax.f32 %v1178, 0.0
        %v1353 = vmax.f32 %v1183, 0.0
        %v1354 = vmax.f32 %v1186, 0.0
        %v1355 = vmax.f32 %v1191, 0.0
        %v1356 = vmax.f32 %v1194, 0.0
        %v1357 = vmax.f32 %v1199, 0.0
        %v1358 = vmax.f32 %v1202, 0.0
        %v1359 = vmax.f32 %v1207, 0.0
        %v1360 = vmax.f32 %v1210, 0.0
        %v1361 = vmax.f32 %v1215, 0.0
        %v1362 = vmax.f32 %v1218, 0.0
        %v1363 = vmax.f32 %v1223, 0.0
        %v1364 = vmax.f32 %v1226, 0.0
        %v1365 = vmax.f32 %v1231, 0.0
        %v1366 = vmax.f32 %v1234, 0.0
        %v1367 = vmax.f32 %v1239, 0.0
        %v1368 = vmax.f32 %v1242, 0.0
        %v1369 = vmax.f32 %v1247, 0.0
        %v1370 = vmax.f32 %v1250, 0.0
        %v1371 = vmax.f32 %v1255, 0.0
        %v1372 = vmax.f32 %v1258, 0.0
        %v1373 = vmax.f32 %v1263, 0.0
        %v1374 = vmax.f32 %v1266, 0.0
        %v1375 = vmax.f32 %v1271, 0.0
        %v1376 = vmax.f32 %v1274, 0.0
        %v1377 = vmax.f32 %v1279, 0.0
        %v1378 = vmax.f32 %v1282, 0.0
        %v1379 = vmax.f32 %v1287, 0.0
        %v1380 = vmax.f32 %v1290, 0.0
        %v1381 = vmax.f32 %v1295, 0.0
        %v1382 = vmax.f32 %v1298, 0.0
        %v1383 = vmax.f32 %v1303, 0.0
        %v1384 = vmax.f32 %v1306, 0.0
        %v1385 = vmax.f32 %v1311, 0.0
        %v1386 = vmax.f32 %v1314, 0.0
        %v1387 = vmax.f32 %v1319, 0.0
        %v1388 = vmax.f32 %v1322, 0.0
        %v1389 = vld [vmem:[%s3] sm:$0xff]
        %v1390 = vld [vmem:[%s3 + $0x8] sm:$0xff]
        %v1391 = vld [vmem:[%s3 + $0x10] sm:$0xff]
        %v1392 = vld [vmem:[%s3 + $0x18] sm:$0xff]
        %v1393 = vld [vmem:[%s3 + $0x20] sm:$0xff]
        %v1394 = vld [vmem:[%s3 + $0x28] sm:$0xff]
        %v1395 = vld [vmem:[%s3 + $0x30] sm:$0xff]
        %v1396 = vld [vmem:[%s3 + $0x38] sm:$0xff]
        %v1397 = vld [vmem:[%s3 + $0x40] sm:$0xff]
        %v1398 = vld [vmem:[%s3 + $0x48] sm:$0xff]
        %v1399 = vld [vmem:[%s3 + $0x50] sm:$0xff]
        %v1400 = vld [vmem:[%s3 + $0x58] sm:$0xff]
        %v1401 = vld [vmem:[%s3 + $0x60] sm:$0xff]
        %v1402 = vld [vmem:[%s3 + $0x68] sm:$0xff]
        %v1403 = vld [vmem:[%s3 + $0x70] sm:$0xff]
        %v1404 = vld [vmem:[%s3 + $0x78] sm:$0xff]
        %v1405 = vld [vmem:[%s3 + $0x80] sm:$0xff]
        %v1406 = vld [vmem:[%s3 + $0x88] sm:$0xff]
        %v1407 = vld [vmem:[%s3 + $0x90] sm:$0xff]
        %v1408 = vld [vmem:[%s3 + $0x98] sm:$0xff]
        %v1409 = vld [vmem:[%s3 + $0xa0] sm:$0xff]
        %v1410 = vld [vmem:[%s3 + $0xa8] sm:$0xff]
        %v1411 = vld [vmem:[%s3 + $0xb0] sm:$0xff]
        %v1412 = vld [vmem:[%s3 + $0xb8] sm:$0xff]
        %v1413 = vld [vmem:[%s3 + $0xc0] sm:$0xff]
        %v1414 = vld [vmem:[%s3 + $0xc8] sm:$0xff]
        %v1415 = vld [vmem:[%s3 + $0xd0] sm:$0xff]
        %v1416 = vld [vmem:[%s3 + $0xd8] sm:$0xff]
        %v1417 = vld [vmem:[%s3 + $0xe0] sm:$0xff]
        %v1418 = vld [vmem:[%s3 + $0xe8] sm:$0xff]
        %v1419 = vld [vmem:[%s3 + $0xf0] sm:$0xff]
        %v1420 = vld [vmem:[%s3 + $0xf8] sm:$0xff]
        %v1421 = vld [vmem:[%s3 + $0x100] sm:$0xff]
        %v1422 = vld [vmem:[%s3 + $0x108] sm:$0xff]
        %v1423 = vld [vmem:[%s3 + $0x110] sm:$0xff]
        %v1424 = vld [vmem:[%s3 + $0x118] sm:$0xff]
        %v1425 = vld [vmem:[%s3 + $0x120] sm:$0xff]
        %v1426 = vld [vmem:[%s3 + $0x128] sm:$0xff]
        %v1427 = vld [vmem:[%s3 + $0x130] sm:$0xff]
        %v1428 = vld [vmem:[%s3 + $0x138] sm:$0xff]
        %v1429 = vld [vmem:[%s3 + $0x140] sm:$0xff]
        %v1430 = vld [vmem:[%s3 + $0x148] sm:$0xff]
        %v1431 = vld [vmem:[%s3 + $0x150] sm:$0xff]
        %v1432 = vld [vmem:[%s3 + $0x158] sm:$0xff]
        %v1433 = vld [vmem:[%s3 + $0x160] sm:$0xff]
        %v1434 = vld [vmem:[%s3 + $0x168] sm:$0xff]
        %v1435 = vld [vmem:[%s3 + $0x170] sm:$0xff]
        %v1436 = vld [vmem:[%s3 + $0x178] sm:$0xff]
        %v1437 = vld [vmem:[%s3 + $0x180] sm:$0xff]
        %v1438 = vld [vmem:[%s3 + $0x188] sm:$0xff]
        %v1439 = vld [vmem:[%s3 + $0x190] sm:$0xff]
        %v1440 = vld [vmem:[%s3 + $0x198] sm:$0xff]
        %v1441 = vld [vmem:[%s3 + $0x1a0] sm:$0xff]
        %v1442 = vld [vmem:[%s3 + $0x1a8] sm:$0xff]
        %v1443 = vld [vmem:[%s3 + $0x1b0] sm:$0xff]
        %v1444 = vld [vmem:[%s3 + $0x1b8] sm:$0xff]
        %v1445 = vld [vmem:[%s3 + $0x1c0] sm:$0xff]
        %v1446 = vld [vmem:[%s3 + $0x1c8] sm:$0xff]
        %v1447 = vld [vmem:[%s3 + $0x1d0] sm:$0xff]
        %v1448 = vld [vmem:[%s3 + $0x1d8] sm:$0xff]
        %v1449 = vld [vmem:[%s3 + $0x1e0] sm:$0xff]
        %v1450 = vld [vmem:[%s3 + $0x1e8] sm:$0xff]
        %v1451 = vld [vmem:[%s3 + $0x1f0] sm:$0xff]
        %v1452 = vld [vmem:[%s3 + $0x1f8] sm:$0xff]
        %v1453 = vpack.c.bf16 %v1326, %v1325
        %v1454 = vpack.c.bf16 %v1328, %v1327
        %v1455 = vpack.c.bf16 %v1330, %v1329
        %v1456 = vpack.c.bf16 %v1332, %v1331
        %v1457 = vpack.c.bf16 %v1334, %v1333
        %v1458 = vpack.c.bf16 %v1336, %v1335
        %v1459 = vpack.c.bf16 %v1338, %v1337
        %v1460 = vpack.c.bf16 %v1340, %v1339
        %v1461 = vpack.c.bf16 %v1342, %v1341
        %v1462 = vpack.c.bf16 %v1344, %v1343
        %v1463 = vpack.c.bf16 %v1346, %v1345
        %v1464 = vpack.c.bf16 %v1348, %v1347
        %v1465 = vpack.c.bf16 %v1350, %v1349
        %v1466 = vpack.c.bf16 %v1352, %v1351
        %v1467 = vpack.c.bf16 %v1354, %v1353
        %v1468 = vpack.c.bf16 %v1356, %v1355
        %v1469 = vpack.c.bf16 %v1358, %v1357
        %v1470 = vpack.c.bf16 %v1360, %v1359
        %v1471 = vpack.c.bf16 %v1362, %v1361
        %v1472 = vpack.c.bf16 %v1364, %v1363
        %v1473 = vpack.c.bf16 %v1366, %v1365
        %v1474 = vpack.c.bf16 %v1368, %v1367
        %v1475 = vpack.c.bf16 %v1370, %v1369
        %v1476 = vpack.c.bf16 %v1372, %v1371
        %v1477 = vpack.c.bf16 %v1374, %v1373
        %v1478 = vpack.c.bf16 %v1376, %v1375
        %v1479 = vpack.c.bf16 %v1378, %v1377
        %v1480 = vpack.c.bf16 %v1380, %v1379
        %v1481 = vpack.c.bf16 %v1382, %v1381
        %v1482 = vpack.c.bf16 %v1384, %v1383
        %v1483 = vpack.c.bf16 %v1386, %v1385
        %v1484 = vpack.c.bf16 %v1388, %v1387
        %v1485 = vld [vmem:[%s4] sm:$0xff]
        %v1486 = vld [vmem:[%s4 + $0x8] sm:$0xff]
        %v1487 = vld [vmem:[%s4 + $0x10] sm:$0xff]
        %v1488 = vld [vmem:[%s4 + $0x18] sm:$0xff]
        %v1489 = vld [vmem:[%s4 + $0x20] sm:$0xff]
        %v1490 = vld [vmem:[%s4 + $0x28] sm:$0xff]
        %v1491 = vld [vmem:[%s4 + $0x30] sm:$0xff]
        %v1492 = vld [vmem:[%s4 + $0x38] sm:$0xff]
        %v1493 = vld [vmem:[%s4 + $0x40] sm:$0xff]
        %v1494 = vld [vmem:[%s4 + $0x48] sm:$0xff]
        %v1495 = vld [vmem:[%s4 + $0x50] sm:$0xff]
        %v1496 = vld [vmem:[%s4 + $0x58] sm:$0xff]
        %v1497 = vld [vmem:[%s4 + $0x60] sm:$0xff]
        %v1498 = vld [vmem:[%s4 + $0x68] sm:$0xff]
        %v1499 = vld [vmem:[%s4 + $0x70] sm:$0xff]
        %v1500 = vld [vmem:[%s4 + $0x78] sm:$0xff]
        %v1501 = vld [vmem:[%s4 + $0x80] sm:$0xff]
        %v1502 = vld [vmem:[%s4 + $0x88] sm:$0xff]
        %v1503 = vld [vmem:[%s4 + $0x90] sm:$0xff]
        %v1504 = vld [vmem:[%s4 + $0x98] sm:$0xff]
        %v1505 = vld [vmem:[%s4 + $0xa0] sm:$0xff]
        %v1506 = vld [vmem:[%s4 + $0xa8] sm:$0xff]
        %v1507 = vld [vmem:[%s4 + $0xb0] sm:$0xff]
        %v1508 = vld [vmem:[%s4 + $0xb8] sm:$0xff]
        %v1509 = vld [vmem:[%s4 + $0xc0] sm:$0xff]
        %v1510 = vld [vmem:[%s4 + $0xc8] sm:$0xff]
        %v1511 = vld [vmem:[%s4 + $0xd0] sm:$0xff]
        %v1512 = vld [vmem:[%s4 + $0xd8] sm:$0xff]
        %v1513 = vld [vmem:[%s4 + $0xe0] sm:$0xff]
        %v1514 = vld [vmem:[%s4 + $0xe8] sm:$0xff]
        %v1515 = vld [vmem:[%s4 + $0xf0] sm:$0xff]
        %v1516 = vld [vmem:[%s4 + $0xf8] sm:$0xff]
        %1518 = vset.pattern.permute.xlu0 0
        %1519 = vperm.xlu0 %1518, %v1485
        %v1520 = vpop.permute.xlu0 %1519
        %1523 = vset.pattern.permute.xlu0 0
        %1524 = vperm.xlu0 %1523, %v1486
        %v1525 = vpop.permute.xlu0 %1524
        %1528 = vset.pattern.permute.xlu0 0
        %1529 = vperm.xlu0 %1528, %v1487
        %v1530 = vpop.permute.xlu0 %1529
        %1533 = vset.pattern.permute.xlu0 0
        %1534 = vperm.xlu0 %1533, %v1488
        %v1535 = vpop.permute.xlu0 %1534
        %1538 = vset.pattern.permute.xlu0 0
        %1539 = vperm.xlu0 %1538, %v1489
        %v1540 = vpop.permute.xlu0 %1539
        %1543 = vset.pattern.permute.xlu0 0
        %1544 = vperm.xlu0 %1543, %v1490
        %v1545 = vpop.permute.xlu0 %1544
        %1548 = vset.pattern.permute.xlu0 0
        %1549 = vperm.xlu0 %1548, %v1491
        %v1550 = vpop.permute.xlu0 %1549
        %1553 = vset.pattern.permute.xlu0 0
        %1554 = vperm.xlu0 %1553, %v1492
        %v1555 = vpop.permute.xlu0 %1554
        %1558 = vset.pattern.permute.xlu0 0
        %1559 = vperm.xlu0 %1558, %v1493
        %v1560 = vpop.permute.xlu0 %1559
        %1563 = vset.pattern.permute.xlu0 0
        %1564 = vperm.xlu0 %1563, %v1494
        %v1565 = vpop.permute.xlu0 %1564
        %1568 = vset.pattern.permute.xlu0 0
        %1569 = vperm.xlu0 %1568, %v1495
        %v1570 = vpop.permute.xlu0 %1569
        %1573 = vset.pattern.permute.xlu0 0
        %1574 = vperm.xlu0 %1573, %v1496
        %v1575 = vpop.permute.xlu0 %1574
        %1578 = vset.pattern.permute.xlu0 0
        %1579 = vperm.xlu0 %1578, %v1497
        %v1580 = vpop.permute.xlu0 %1579
        %1583 = vset.pattern.permute.xlu0 0
        %1584 = vperm.xlu0 %1583, %v1498
        %v1585 = vpop.permute.xlu0 %1584
        %1588 = vset.pattern.permute.xlu0 0
        %1589 = vperm.xlu0 %1588, %v1499
        %v1590 = vpop.permute.xlu0 %1589
        %1593 = vset.pattern.permute.xlu0 0
        %1594 = vperm.xlu0 %1593, %v1500
        %v1595 = vpop.permute.xlu0 %1594
        %1598 = vset.pattern.permute.xlu0 0
        %1599 = vperm.xlu0 %1598, %v1501
        %v1600 = vpop.permute.xlu0 %1599
        %1603 = vset.pattern.permute.xlu0 0
        %1604 = vperm.xlu0 %1603, %v1502
        %v1605 = vpop.permute.xlu0 %1604
        %1608 = vset.pattern.permute.xlu0 0
        %1609 = vperm.xlu0 %1608, %v1503
        %v1610 = vpop.permute.xlu0 %1609
        %1613 = vset.pattern.permute.xlu0 0
        %1614 = vperm.xlu0 %1613, %v1504
        %v1615 = vpop.permute.xlu0 %1614
        %1618 = vset.pattern.permute.xlu0 0
        %1619 = vperm.xlu0 %1618, %v1505
        %v1620 = vpop.permute.xlu0 %1619
        %1623 = vset.pattern.permute.xlu0 0
        %1624 = vperm.xlu0 %1623, %v1506
        %v1625 = vpop.permute.xlu0 %1624
        %1628 = vset.pattern.permute.xlu0 0
        %1629 = vperm.xlu0 %1628, %v1507
        %v1630 = vpop.permute.xlu0 %1629
        %1633 = vset.pattern.permute.xlu0 0
        %1634 = vperm.xlu0 %1633, %v1508
        %v1635 = vpop.permute.xlu0 %1634
        %1638 = vset.pattern.permute.xlu0 0
        %1639 = vperm.xlu0 %1638, %v1509
        %v1640 = vpop.permute.xlu0 %1639
        %1643 = vset.pattern.permute.xlu0 0
        %1644 = vperm.xlu0 %1643, %v1510
        %v1645 = vpop.permute.xlu0 %1644
        %1648 = vset.pattern.permute.xlu0 0
        %1649 = vperm.xlu0 %1648, %v1511
        %v1650 = vpop.permute.xlu0 %1649
        %1653 = vset.pattern.permute.xlu0 0
        %1654 = vperm.xlu0 %1653, %v1512
        %v1655 = vpop.permute.xlu0 %1654
        %1658 = vset.pattern.permute.xlu0 0
        %1659 = vperm.xlu0 %1658, %v1513
        %v1660 = vpop.permute.xlu0 %1659
        %1663 = vset.pattern.permute.xlu0 0
        %1664 = vperm.xlu0 %1663, %v1514
        %v1665 = vpop.permute.xlu0 %1664
        %1668 = vset.pattern.permute.xlu0 0
        %1669 = vperm.xlu0 %1668, %v1515
        %v1670 = vpop.permute.xlu0 %1669
        %1673 = vset.pattern.permute.xlu0 0
        %1674 = vperm.xlu0 %1673, %v1516
        %v1675 = vpop.permute.xlu0 %1674
        %v1741 = vunpack.c.l.b16 %v1389
        %v1742 = vunpack.c.h.b16 %v1389
        %v1743 = vunpack.c.l.b16 %v1390
        %v1744 = vunpack.c.h.b16 %v1390
        %v1745 = vunpack.c.l.b16 %v1391
        %v1746 = vunpack.c.h.b16 %v1391
        %v1747 = vunpack.c.l.b16 %v1392
        %v1748 = vunpack.c.h.b16 %v1392
        %v1749 = vunpack.c.l.b16 %v1393
        %v1750 = vunpack.c.h.b16 %v1393
        %v1751 = vunpack.c.l.b16 %v1394
        %v1752 = vunpack.c.h.b16 %v1394
        %v1753 = vunpack.c.l.b16 %v1395
        %v1754 = vunpack.c.h.b16 %v1395
        %v1755 = vunpack.c.l.b16 %v1396
        %v1756 = vunpack.c.h.b16 %v1396
        %v1757 = vunpack.c.l.b16 %v1397
        %v1758 = vunpack.c.h.b16 %v1397
        %v1759 = vunpack.c.l.b16 %v1398
        %v1760 = vunpack.c.h.b16 %v1398
        %v1761 = vunpack.c.l.b16 %v1399
        %v1762 = vunpack.c.h.b16 %v1399
        %v1763 = vunpack.c.l.b16 %v1400
        %v1764 = vunpack.c.h.b16 %v1400
        %v1765 = vunpack.c.l.b16 %v1401
        %v1766 = vunpack.c.h.b16 %v1401
        %v1767 = vunpack.c.l.b16 %v1402
        %v1768 = vunpack.c.h.b16 %v1402
        %v1769 = vunpack.c.l.b16 %v1403
        %v1770 = vunpack.c.h.b16 %v1403
        %v1771 = vunpack.c.l.b16 %v1404
        %v1772 = vunpack.c.h.b16 %v1404
        %v1773 = vunpack.c.l.b16 %v1405
        %v1774 = vunpack.c.h.b16 %v1405
        %v1775 = vunpack.c.l.b16 %v1406
        %v1776 = vunpack.c.h.b16 %v1406
        %v1777 = vunpack.c.l.b16 %v1407
        %v1778 = vunpack.c.h.b16 %v1407
        %v1779 = vunpack.c.l.b16 %v1408
        %v1780 = vunpack.c.h.b16 %v1408
        %v1781 = vunpack.c.l.b16 %v1409
        %v1782 = vunpack.c.h.b16 %v1409
        %v1783 = vunpack.c.l.b16 %v1410
        %v1784 = vunpack.c.h.b16 %v1410
        %v1785 = vunpack.c.l.b16 %v1411
        %v1786 = vunpack.c.h.b16 %v1411
        %v1787 = vunpack.c.l.b16 %v1412
        %v1788 = vunpack.c.h.b16 %v1412
        %v1789 = vunpack.c.l.b16 %v1413
        %v1790 = vunpack.c.h.b16 %v1413
        %v1791 = vunpack.c.l.b16 %v1414
        %v1792 = vunpack.c.h.b16 %v1414
        %v1793 = vunpack.c.l.b16 %v1415
        %v1794 = vunpack.c.h.b16 %v1415
        %v1795 = vunpack.c.l.b16 %v1416
        %v1796 = vunpack.c.h.b16 %v1416
        %v1797 = vunpack.c.l.b16 %v1417
        %v1798 = vunpack.c.h.b16 %v1417
        %v1799 = vunpack.c.l.b16 %v1418
        %v1800 = vunpack.c.h.b16 %v1418
        %v1801 = vunpack.c.l.b16 %v1419
        %v1802 = vunpack.c.h.b16 %v1419
        %v1803 = vunpack.c.l.b16 %v1420
        %v1804 = vunpack.c.h.b16 %v1420
        %v1805 = vunpack.c.l.b16 %v1421
        %v1806 = vunpack.c.h.b16 %v1421
        %v1807 = vunpack.c.l.b16 %v1422
        %v1808 = vunpack.c.h.b16 %v1422
        %v1809 = vunpack.c.l.b16 %v1423
        %v1810 = vunpack.c.h.b16 %v1423
        %v1811 = vunpack.c.l.b16 %v1424
        %v1812 = vunpack.c.h.b16 %v1424
        %v1813 = vunpack.c.l.b16 %v1425
        %v1814 = vunpack.c.h.b16 %v1425
        %v1815 = vunpack.c.l.b16 %v1426
        %v1816 = vunpack.c.h.b16 %v1426
        %v1817 = vunpack.c.l.b16 %v1427
        %v1818 = vunpack.c.h.b16 %v1427
        %v1819 = vunpack.c.l.b16 %v1428
        %v1820 = vunpack.c.h.b16 %v1428
        %v1821 = vunpack.c.l.b16 %v1429
        %v1822 = vunpack.c.h.b16 %v1429
        %v1823 = vunpack.c.l.b16 %v1430
        %v1824 = vunpack.c.h.b16 %v1430
        %v1825 = vunpack.c.l.b16 %v1431
        %v1826 = vunpack.c.h.b16 %v1431
        %v1827 = vunpack.c.l.b16 %v1432
        %v1828 = vunpack.c.h.b16 %v1432
        %v1829 = vunpack.c.l.b16 %v1433
        %v1830 = vunpack.c.h.b16 %v1433
        %v1831 = vunpack.c.l.b16 %v1434
        %v1832 = vunpack.c.h.b16 %v1434
        %v1833 = vunpack.c.l.b16 %v1435
        %v1834 = vunpack.c.h.b16 %v1435
        %v1835 = vunpack.c.l.b16 %v1436
        %v1836 = vunpack.c.h.b16 %v1436
        %v1837 = vunpack.c.l.b16 %v1437
        %v1838 = vunpack.c.h.b16 %v1437
        %v1839 = vunpack.c.l.b16 %v1438
        %v1840 = vunpack.c.h.b16 %v1438
        %v1841 = vunpack.c.l.b16 %v1439
        %v1842 = vunpack.c.h.b16 %v1439
        %v1843 = vunpack.c.l.b16 %v1440
        %v1844 = vunpack.c.h.b16 %v1440
        %v1845 = vunpack.c.l.b16 %v1441
        %v1846 = vunpack.c.h.b16 %v1441
        %v1847 = vunpack.c.l.b16 %v1442
        %v1848 = vunpack.c.h.b16 %v1442
        %v1849 = vunpack.c.l.b16 %v1443
        %v1850 = vunpack.c.h.b16 %v1443
        %v1851 = vunpack.c.l.b16 %v1444
        %v1852 = vunpack.c.h.b16 %v1444
        %v1853 = vunpack.c.l.b16 %v1445
        %v1854 = vunpack.c.h.b16 %v1445
        %v1855 = vunpack.c.l.b16 %v1446
        %v1856 = vunpack.c.h.b16 %v1446
        %v1857 = vunpack.c.l.b16 %v1447
        %v1858 = vunpack.c.h.b16 %v1447
        %v1859 = vunpack.c.l.b16 %v1448
        %v1860 = vunpack.c.h.b16 %v1448
        %v1861 = vunpack.c.l.b16 %v1449
        %v1862 = vunpack.c.h.b16 %v1449
        %v1863 = vunpack.c.l.b16 %v1450
        %v1864 = vunpack.c.h.b16 %v1450
        %v1865 = vunpack.c.l.b16 %v1451
        %v1866 = vunpack.c.h.b16 %v1451
        %v1867 = vunpack.c.l.b16 %v1452
        %v1868 = vunpack.c.h.b16 %v1452
        %v1869 = vpack.c.b16 %v1745, %v1741
        %v1870 = vpack.c.b16 %v1746, %v1742
        %v1871 = vpack.c.b16 %v1747, %v1743
        %v1872 = vpack.c.b16 %v1748, %v1744
        %v1873 = vpack.c.b16 %v1753, %v1749
        %v1874 = vpack.c.b16 %v1754, %v1750
        %v1875 = vpack.c.b16 %v1755, %v1751
        %v1876 = vpack.c.b16 %v1756, %v1752
        %v1877 = vpack.c.b16 %v1761, %v1757
        %v1878 = vpack.c.b16 %v1762, %v1758
        %v1879 = vpack.c.b16 %v1763, %v1759
        %v1880 = vpack.c.b16 %v1764, %v1760
        %v1881 = vpack.c.b16 %v1769, %v1765
        %v1882 = vpack.c.b16 %v1770, %v1766
        %v1883 = vpack.c.b16 %v1771, %v1767
        %v1884 = vpack.c.b16 %v1772, %v1768
        %v1885 = vpack.c.b16 %v1777, %v1773
        %v1886 = vpack.c.b16 %v1778, %v1774
        %v1887 = vpack.c.b16 %v1779, %v1775
        %v1888 = vpack.c.b16 %v1780, %v1776
        %v1889 = vpack.c.b16 %v1785, %v1781
        %v1890 = vpack.c.b16 %v1786, %v1782
        %v1891 = vpack.c.b16 %v1787, %v1783
        %v1892 = vpack.c.b16 %v1788, %v1784
        %v1893 = vpack.c.b16 %v1793, %v1789
        %v1894 = vpack.c.b16 %v1794, %v1790
        %v1895 = vpack.c.b16 %v1795, %v1791
        %v1896 = vpack.c.b16 %v1796, %v1792
        %v1897 = vpack.c.b16 %v1801, %v1797
        %v1898 = vpack.c.b16 %v1802, %v1798
        %v1899 = vpack.c.b16 %v1803, %v1799
        %v1900 = vpack.c.b16 %v1804, %v1800
        %v1901 = vpack.c.b16 %v1809, %v1805
        %v1902 = vpack.c.b16 %v1810, %v1806
        %v1903 = vpack.c.b16 %v1811, %v1807
        %v1904 = vpack.c.b16 %v1812, %v1808
        %v1905 = vpack.c.b16 %v1817, %v1813
        %v1906 = vpack.c.b16 %v1818, %v1814
        %v1907 = vpack.c.b16 %v1819, %v1815
        %v1908 = vpack.c.b16 %v1820, %v1816
        %v1909 = vpack.c.b16 %v1825, %v1821
        %v1910 = vpack.c.b16 %v1826, %v1822
        %v1911 = vpack.c.b16 %v1827, %v1823
        %v1912 = vpack.c.b16 %v1828, %v1824
        %v1913 = vpack.c.b16 %v1833, %v1829
        %v1914 = vpack.c.b16 %v1834, %v1830
        %v1915 = vpack.c.b16 %v1835, %v1831
        %v1916 = vpack.c.b16 %v1836, %v1832
        %v1917 = vpack.c.b16 %v1841, %v1837
        %v1918 = vpack.c.b16 %v1842, %v1838
        %v1919 = vpack.c.b16 %v1843, %v1839
        %v1920 = vpack.c.b16 %v1844, %v1840
        %v1921 = vpack.c.b16 %v1849, %v1845
        %v1922 = vpack.c.b16 %v1850, %v1846
        %v1923 = vpack.c.b16 %v1851, %v1847
        %v1924 = vpack.c.b16 %v1852, %v1848
        %v1925 = vpack.c.b16 %v1857, %v1853
        %v1926 = vpack.c.b16 %v1858, %v1854
        %v1927 = vpack.c.b16 %v1859, %v1855
        %v1928 = vpack.c.b16 %v1860, %v1856
        %v1929 = vpack.c.b16 %v1865, %v1861
        %v1930 = vpack.c.b16 %v1866, %v1862
        %v1931 = vpack.c.b16 %v1867, %v1863
        %v1932 = vpack.c.b16 %v1868, %v1864
        %1997 = vmatprep.subr.bf16.mxu0 0
        %1998 = vmatpush1.bf16.msra.mxu0 %v1453
        %1999 = vmatprep.subr.bf16.mxu0 0
        %2000 = vmatpush1.bf16.msra.mxu0 %v1454
        %2001 = vmatprep.subr.bf16.mxu0 0
        %2002 = vmatpush1.bf16.msra.mxu0 %v1455
        %2003 = vmatprep.subr.bf16.mxu0 0
        %2004 = vmatpush1.bf16.msra.mxu0 %v1456
        %2005 = vmatprep.subr.bf16.mxu0 0
        %2006 = vmatpush1.bf16.msra.mxu0 %v1457
        %2007 = vmatprep.subr.bf16.mxu0 0
        %2008 = vmatpush1.bf16.msra.mxu0 %v1458
        %2009 = vmatprep.subr.bf16.mxu0 0
        %2010 = vmatpush1.bf16.msra.mxu0 %v1459
        %2011 = vmatprep.subr.bf16.mxu0 0
        %2012 = vmatpush1.bf16.msra.mxu0 %v1460
        %2013 = vmatprep.subr.bf16.mxu0 0
        %2014 = vmatpush1.bf16.msra.mxu0 %v1461
        %2015 = vmatprep.subr.bf16.mxu0 0
        %2016 = vmatpush1.bf16.msra.mxu0 %v1462
        %2017 = vmatprep.subr.bf16.mxu0 0
        %2018 = vmatpush1.bf16.msra.mxu0 %v1463
        %2019 = vmatprep.subr.bf16.mxu0 0
        %2020 = vmatpush1.bf16.msra.mxu0 %v1464
        %2021 = vmatprep.subr.bf16.mxu0 0
        %2022 = vmatpush1.bf16.msra.mxu0 %v1465
        %2023 = vmatprep.subr.bf16.mxu0 0
        %2024 = vmatpush1.bf16.msra.mxu0 %v1466
        %2025 = vmatprep.subr.bf16.mxu0 0
        %2026 = vmatpush1.bf16.msra.mxu0 %v1467
        %2027 = vmatprep.subr.bf16.mxu0 0
        %2028 = vmatpush1.bf16.msra.mxu0 %v1468
        %2029 = vmatprep.mubr.bf16.mxu0 %v1870
        %2030 = vmatmul.mubr.bf16.gmra.mrb[0].mxu0 %v1869
        %v2031 = vpop.f32.mrb[0].mxu0
        %v2032 = vadd.f32 %v1520, %v2031
        %v2033 = vpop.f32.mrb[0].mxu0
        %v2034 = vpop.f32.mrb[0].mxu0
        %v2035 = vadd.f32 %v1525, %v2034
        %v2036 = vpop.f32.mrb[0].mxu0
        %2037 = vmatprep.mubr.bf16.mxu0 %v1874
        %2038 = vmatmul.mubr.bf16.gmra.mrb[0].mxu0 %v1873
        %v2039 = vpop.f32.mrb[0].mxu0
        %v2040 = vadd.f32 %v1530, %v2039
        %v2041 = vpop.f32.mrb[0].mxu0
        %v2042 = vpop.f32.mrb[0].mxu0
        %v2043 = vadd.f32 %v1535, %v2042
        %v2044 = vpop.f32.mrb[0].mxu0
        %2045 = vmatprep.mubr.bf16.mxu0 %v1878
        %2046 = vmatmul.mubr.bf16.gmra.mrb[0].mxu0 %v1877
        %v2047 = vpop.f32.mrb[0].mxu0
        %v2048 = vadd.f32 %v1540, %v2047
        %v2049 = vpop.f32.mrb[0].mxu0
        %v2050 = vpop.f32.mrb[0].mxu0
        %v2051 = vadd.f32 %v1545, %v2050
        %v2052 = vpop.f32.mrb[0].mxu0
        %2053 = vmatprep.mubr.bf16.mxu0 %v1882
        %2054 = vmatmul.mubr.bf16.gmra.mrb[0].mxu0 %v1881
        %v2055 = vpop.f32.mrb[0].mxu0
        %v2056 = vadd.f32 %v1550, %v2055
        %v2057 = vpop.f32.mrb[0].mxu0
        %v2058 = vpop.f32.mrb[0].mxu0
        %v2059 = vadd.f32 %v1555, %v2058
        %v2060 = vpop.f32.mrb[0].mxu0
        %2061 = vmatprep.mubr.bf16.mxu0 %v1886
        %2062 = vmatmul.mubr.bf16.gmra.mrb[0].mxu0 %v1885
        %v2063 = vpop.f32.mrb[0].mxu0
        %v2064 = vadd.f32 %v1560, %v2063
        %v2065 = vpop.f32.mrb[0].mxu0
        %v2066 = vpop.f32.mrb[0].mxu0
        %v2067 = vadd.f32 %v1565, %v2066
        %v2068 = vpop.f32.mrb[0].mxu0
        %2069 = vmatprep.mubr.bf16.mxu0 %v1890
        %2070 = vmatmul.mubr.bf16.gmra.mrb[0].mxu0 %v1889
        %v2071 = vpop.f32.mrb[0].mxu0
        %v2072 = vadd.f32 %v1570, %v2071
        %v2073 = vpop.f32.mrb[0].mxu0
        %v2074 = vpop.f32.mrb[0].mxu0
        %v2075 = vadd.f32 %v1575, %v2074
        %v2076 = vpop.f32.mrb[0].mxu0
        %2077 = vmatprep.mubr.bf16.mxu0 %v1894
        %2078 = vmatmul.mubr.bf16.gmra.mrb[0].mxu0 %v1893
        %v2079 = vpop.f32.mrb[0].mxu0
        %v2080 = vadd.f32 %v1580, %v2079
        %v2081 = vpop.f32.mrb[0].mxu0
        %v2082 = vpop.f32.mrb[0].mxu0
        %v2083 = vadd.f32 %v1585, %v2082
        %v2084 = vpop.f32.mrb[0].mxu0
        %2085 = vmatprep.mubr.bf16.mxu0 %v1898
        %2086 = vmatmul.mubr.bf16.gmra.mrb[0].mxu0 %v1897
        %v2087 = vpop.f32.mrb[0].mxu0
        %v2088 = vadd.f32 %v1590, %v2087
        %v2089 = vpop.f32.mrb[0].mxu0
        %v2090 = vpop.f32.mrb[0].mxu0
        %v2091 = vadd.f32 %v1595, %v2090
        %v2092 = vpop.f32.mrb[0].mxu0
        %2093 = vmatprep.mubr.bf16.mxu0 %v1902
        %2094 = vmatmul.mubr.bf16.gmra.mrb[0].mxu0 %v1901
        %v2095 = vpop.f32.mrb[0].mxu0
        %v2096 = vadd.f32 %v1600, %v2095
        %v2097 = vpop.f32.mrb[0].mxu0
        %v2098 = vpop.f32.mrb[0].mxu0
        %v2099 = vadd.f32 %v1605, %v2098
        %v2100 = vpop.f32.mrb[0].mxu0
        %2101 = vmatprep.mubr.bf16.mxu0 %v1906
        %2102 = vmatmul.mubr.bf16.gmra.mrb[0].mxu0 %v1905
        %v2103 = vpop.f32.mrb[0].mxu0
        %v2104 = vadd.f32 %v1610, %v2103
        %v2105 = vpop.f32.mrb[0].mxu0
        %v2106 = vpop.f32.mrb[0].mxu0
        %v2107 = vadd.f32 %v1615, %v2106
        %v2108 = vpop.f32.mrb[0].mxu0
        %2109 = vmatprep.mubr.bf16.mxu0 %v1910
        %2110 = vmatmul.mubr.bf16.gmra.mrb[0].mxu0 %v1909
        %v2111 = vpop.f32.mrb[0].mxu0
        %v2112 = vadd.f32 %v1620, %v2111
        %v2113 = vpop.f32.mrb[0].mxu0
        %v2114 = vpop.f32.mrb[0].mxu0
        %v2115 = vadd.f32 %v1625, %v2114
        %v2116 = vpop.f32.mrb[0].mxu0
        %2117 = vmatprep.mubr.bf16.mxu0 %v1914
        %2118 = vmatmul.mubr.bf16.gmra.mrb[0].mxu0 %v1913
        %v2119 = vpop.f32.mrb[0].mxu0
        %v2120 = vadd.f32 %v1630, %v2119
        %v2121 = vpop.f32.mrb[0].mxu0
        %v2122 = vpop.f32.mrb[0].mxu0
        %v2123 = vadd.f32 %v1635, %v2122
        %v2124 = vpop.f32.mrb[0].mxu0
        %2125 = vmatprep.mubr.bf16.mxu0 %v1918
        %2126 = vmatmul.mubr.bf16.gmra.mrb[0].mxu0 %v1917
        %v2127 = vpop.f32.mrb[0].mxu0
        %v2128 = vadd.f32 %v1640, %v2127
        %v2129 = vpop.f32.mrb[0].mxu0
        %v2130 = vpop.f32.mrb[0].mxu0
        %v2131 = vadd.f32 %v1645, %v2130
        %v2132 = vpop.f32.mrb[0].mxu0
        %2133 = vmatprep.mubr.bf16.mxu0 %v1922
        %2134 = vmatmul.mubr.bf16.gmra.mrb[0].mxu0 %v1921
        %v2135 = vpop.f32.mrb[0].mxu0
        %v2136 = vadd.f32 %v1650, %v2135
        %v2137 = vpop.f32.mrb[0].mxu0
        %v2138 = vpop.f32.mrb[0].mxu0
        %v2139 = vadd.f32 %v1655, %v2138
        %v2140 = vpop.f32.mrb[0].mxu0
        %2141 = vmatprep.mubr.bf16.mxu0 %v1926
        %2142 = vmatmul.mubr.bf16.gmra.mrb[0].mxu0 %v1925
        %v2143 = vpop.f32.mrb[0].mxu0
        %v2144 = vadd.f32 %v1660, %v2143
        %v2145 = vpop.f32.mrb[0].mxu0
        %v2146 = vpop.f32.mrb[0].mxu0
        %v2147 = vadd.f32 %v1665, %v2146
        %v2148 = vpop.f32.mrb[0].mxu0
        %2149 = vmatprep.mubr.bf16.mxu0 %v1930
        %2150 = vmatmul.mubr.bf16.gmra.mrb[0].mxu0 %v1929
        %v2151 = vpop.f32.mrb[0].mxu0
        %v2152 = vadd.f32 %v1670, %v2151
        %v2153 = vpop.f32.mrb[0].mxu0
        %v2154 = vpop.f32.mrb[0].mxu0
        %v2155 = vadd.f32 %v1675, %v2154
        %v2156 = vpop.f32.mrb[0].mxu0
        %2157 = vdwg.mxu0
        %2158 = vmatprep.subr.bf16.mxu0 0
        %2159 = vmatpush1.bf16.msra.mxu0 %v1469
        %2160 = vmatprep.subr.bf16.mxu0 0
        %2161 = vmatpush1.bf16.msra.mxu0 %v1470
        %2162 = vmatprep.subr.bf16.mxu0 0
        %2163 = vmatpush1.bf16.msra.mxu0 %v1471
        %2164 = vmatprep.subr.bf16.mxu0 0
        %2165 = vmatpush1.bf16.msra.mxu0 %v1472
        %2166 = vmatprep.subr.bf16.mxu0 0
        %2167 = vmatpush1.bf16.msra.mxu0 %v1473
        %2168 = vmatprep.subr.bf16.mxu0 0
        %2169 = vmatpush1.bf16.msra.mxu0 %v1474
        %2170 = vmatprep.subr.bf16.mxu0 0
        %2171 = vmatpush1.bf16.msra.mxu0 %v1475
        %2172 = vmatprep.subr.bf16.mxu0 0
        %2173 = vmatpush1.bf16.msra.mxu0 %v1476
        %2174 = vmatprep.subr.bf16.mxu0 0
        %2175 = vmatpush1.bf16.msra.mxu0 %v1477
        %2176 = vmatprep.subr.bf16.mxu0 0
        %2177 = vmatpush1.bf16.msra.mxu0 %v1478
        %2178 = vmatprep.subr.bf16.mxu0 0
        %2179 = vmatpush1.bf16.msra.mxu0 %v1479
        %2180 = vmatprep.subr.bf16.mxu0 0
        %2181 = vmatpush1.bf16.msra.mxu0 %v1480
        %2182 = vmatprep.subr.bf16.mxu0 0
        %2183 = vmatpush1.bf16.msra.mxu0 %v1481
        %2184 = vmatprep.subr.bf16.mxu0 0
        %2185 = vmatpush1.bf16.msra.mxu0 %v1482
        %2186 = vmatprep.subr.bf16.mxu0 0
        %2187 = vmatpush1.bf16.msra.mxu0 %v1483
        %2188 = vmatprep.subr.bf16.mxu0 0
        %2189 = vmatpush1.bf16.msra.mxu0 %v1484
        %2190 = vmatprep.mubr.bf16.mxu0 %v1872
        %2191 = vmatmul.mubr.bf16.gmra.mrb[0].mxu0 %v1871
        %v2192 = vpop.f32.mrb[0].mxu0
        %v2193 = vadd.f32 %v2032, %v2192
        %v2194 = vpop.f32.mrb[0].mxu0
        %v2195 = vpop.f32.mrb[0].mxu0
        %v2196 = vadd.f32 %v2035, %v2195
        %v2197 = vpop.f32.mrb[0].mxu0
        %2198 = vmatprep.mubr.bf16.mxu0 %v1876
        %2199 = vmatmul.mubr.bf16.gmra.mrb[0].mxu0 %v1875
        %v2200 = vpop.f32.mrb[0].mxu0
        %v2201 = vadd.f32 %v2040, %v2200
        %v2202 = vpop.f32.mrb[0].mxu0
        %v2203 = vpop.f32.mrb[0].mxu0
        %v2204 = vadd.f32 %v2043, %v2203
        %v2205 = vpop.f32.mrb[0].mxu0
        %2206 = vmatprep.mubr.bf16.mxu0 %v1880
        %2207 = vmatmul.mubr.bf16.gmra.mrb[0].mxu0 %v1879
        %v2208 = vpop.f32.mrb[0].mxu0
        %v2209 = vadd.f32 %v2048, %v2208
        %v2210 = vpop.f32.mrb[0].mxu0
        %v2211 = vpop.f32.mrb[0].mxu0
        %v2212 = vadd.f32 %v2051, %v2211
        %v2213 = vpop.f32.mrb[0].mxu0
        %2214 = vmatprep.mubr.bf16.mxu0 %v1884
        %2215 = vmatmul.mubr.bf16.gmra.mrb[0].mxu0 %v1883
        %v2216 = vpop.f32.mrb[0].mxu0
        %v2217 = vadd.f32 %v2056, %v2216
        %v2218 = vpop.f32.mrb[0].mxu0
        %v2219 = vpop.f32.mrb[0].mxu0
        %v2220 = vadd.f32 %v2059, %v2219
        %v2221 = vpop.f32.mrb[0].mxu0
        %2222 = vmatprep.mubr.bf16.mxu0 %v1888
        %2223 = vmatmul.mubr.bf16.gmra.mrb[0].mxu0 %v1887
        %v2224 = vpop.f32.mrb[0].mxu0
        %v2225 = vadd.f32 %v2064, %v2224
        %v2226 = vpop.f32.mrb[0].mxu0
        %v2227 = vpop.f32.mrb[0].mxu0
        %v2228 = vadd.f32 %v2067, %v2227
        %v2229 = vpop.f32.mrb[0].mxu0
        %2230 = vmatprep.mubr.bf16.mxu0 %v1892
        %2231 = vmatmul.mubr.bf16.gmra.mrb[0].mxu0 %v1891
        %v2232 = vpop.f32.mrb[0].mxu0
        %v2233 = vadd.f32 %v2072, %v2232
        %v2234 = vpop.f32.mrb[0].mxu0
        %v2235 = vpop.f32.mrb[0].mxu0
        %v2236 = vadd.f32 %v2075, %v2235
        %v2237 = vpop.f32.mrb[0].mxu0
        %2238 = vmatprep.mubr.bf16.mxu0 %v1896
        %2239 = vmatmul.mubr.bf16.gmra.mrb[0].mxu0 %v1895
        %v2240 = vpop.f32.mrb[0].mxu0
        %v2241 = vadd.f32 %v2080, %v2240
        %v2242 = vpop.f32.mrb[0].mxu0
        %v2243 = vpop.f32.mrb[0].mxu0
        %v2244 = vadd.f32 %v2083, %v2243
        %v2245 = vpop.f32.mrb[0].mxu0
        %2246 = vmatprep.mubr.bf16.mxu0 %v1900
        %2247 = vmatmul.mubr.bf16.gmra.mrb[0].mxu0 %v1899
        %v2248 = vpop.f32.mrb[0].mxu0
        %v2249 = vadd.f32 %v2088, %v2248
        %v2250 = vpop.f32.mrb[0].mxu0
        %v2251 = vpop.f32.mrb[0].mxu0
        %v2252 = vadd.f32 %v2091, %v2251
        %v2253 = vpop.f32.mrb[0].mxu0
        %2254 = vmatprep.mubr.bf16.mxu0 %v1904
        %2255 = vmatmul.mubr.bf16.gmra.mrb[0].mxu0 %v1903
        %v2256 = vpop.f32.mrb[0].mxu0
        %v2257 = vadd.f32 %v2096, %v2256
        %v2258 = vpop.f32.mrb[0].mxu0
        %v2259 = vpop.f32.mrb[0].mxu0
        %v2260 = vadd.f32 %v2099, %v2259
        %v2261 = vpop.f32.mrb[0].mxu0
        %2262 = vmatprep.mubr.bf16.mxu0 %v1908
        %2263 = vmatmul.mubr.bf16.gmra.mrb[0].mxu0 %v1907
        %v2264 = vpop.f32.mrb[0].mxu0
        %v2265 = vadd.f32 %v2104, %v2264
        %v2266 = vpop.f32.mrb[0].mxu0
        %v2267 = vpop.f32.mrb[0].mxu0
        %v2268 = vadd.f32 %v2107, %v2267
        %v2269 = vpop.f32.mrb[0].mxu0
        %2270 = vmatprep.mubr.bf16.mxu0 %v1912
        %2271 = vmatmul.mubr.bf16.gmra.mrb[0].mxu0 %v1911
        %v2272 = vpop.f32.mrb[0].mxu0
        %v2273 = vadd.f32 %v2112, %v2272
        %v2274 = vpop.f32.mrb[0].mxu0
        %v2275 = vpop.f32.mrb[0].mxu0
        %v2276 = vadd.f32 %v2115, %v2275
        %v2277 = vpop.f32.mrb[0].mxu0
        %2278 = vmatprep.mubr.bf16.mxu0 %v1916
        %2279 = vmatmul.mubr.bf16.gmra.mrb[0].mxu0 %v1915
        %v2280 = vpop.f32.mrb[0].mxu0
        %v2281 = vadd.f32 %v2120, %v2280
        %v2282 = vpop.f32.mrb[0].mxu0
        %v2283 = vpop.f32.mrb[0].mxu0
        %v2284 = vadd.f32 %v2123, %v2283
        %v2285 = vpop.f32.mrb[0].mxu0
        %2286 = vmatprep.mubr.bf16.mxu0 %v1920
        %2287 = vmatmul.mubr.bf16.gmra.mrb[0].mxu0 %v1919
        %v2288 = vpop.f32.mrb[0].mxu0
        %v2289 = vadd.f32 %v2128, %v2288
        %v2290 = vpop.f32.mrb[0].mxu0
        %v2291 = vpop.f32.mrb[0].mxu0
        %v2292 = vadd.f32 %v2131, %v2291
        %v2293 = vpop.f32.mrb[0].mxu0
        %2294 = vmatprep.mubr.bf16.mxu0 %v1924
        %2295 = vmatmul.mubr.bf16.gmra.mrb[0].mxu0 %v1923
        %v2296 = vpop.f32.mrb[0].mxu0
        %v2297 = vadd.f32 %v2136, %v2296
        %v2298 = vpop.f32.mrb[0].mxu0
        %v2299 = vpop.f32.mrb[0].mxu0
        %v2300 = vadd.f32 %v2139, %v2299
        %v2301 = vpop.f32.mrb[0].mxu0
        %2302 = vmatprep.mubr.bf16.mxu0 %v1928
        %2303 = vmatmul.mubr.bf16.gmra.mrb[0].mxu0 %v1927
        %v2304 = vpop.f32.mrb[0].mxu0
        %v2305 = vadd.f32 %v2144, %v2304
        %v2306 = vpop.f32.mrb[0].mxu0
        %v2307 = vpop.f32.mrb[0].mxu0
        %v2308 = vadd.f32 %v2147, %v2307
        %v2309 = vpop.f32.mrb[0].mxu0
        %2310 = vmatprep.mubr.bf16.mxu0 %v1932
        %2311 = vmatmul.mubr.bf16.gmra.mrb[0].mxu0 %v1931
        %v2312 = vpop.f32.mrb[0].mxu0
        %v2313 = vadd.f32 %v2152, %v2312
        %v2314 = vpop.f32.mrb[0].mxu0
        %v2315 = vpop.f32.mrb[0].mxu0
        %v2316 = vadd.f32 %v2155, %v2315
        %v2317 = vpop.f32.mrb[0].mxu0
        %2318 = vdwg.mxu0
        %v2319 = vmax.f32 %v2193, 0.0
        %v2320 = vmax.f32 %v2196, 0.0
        %v2321 = vmax.f32 %v2201, 0.0
        %v2322 = vmax.f32 %v2204, 0.0
        %v2323 = vmax.f32 %v2209, 0.0
        %v2324 = vmax.f32 %v2212, 0.0
        %v2325 = vmax.f32 %v2217, 0.0
        %v2326 = vmax.f32 %v2220, 0.0
        %v2327 = vmax.f32 %v2225, 0.0
        %v2328 = vmax.f32 %v2228, 0.0
        %v2329 = vmax.f32 %v2233, 0.0
        %v2330 = vmax.f32 %v2236, 0.0
        %v2331 = vmax.f32 %v2241, 0.0
        %v2332 = vmax.f32 %v2244, 0.0
        %v2333 = vmax.f32 %v2249, 0.0
        %v2334 = vmax.f32 %v2252, 0.0
        %v2335 = vmax.f32 %v2257, 0.0
        %v2336 = vmax.f32 %v2260, 0.0
        %v2337 = vmax.f32 %v2265, 0.0
        %v2338 = vmax.f32 %v2268, 0.0
        %v2339 = vmax.f32 %v2273, 0.0
        %v2340 = vmax.f32 %v2276, 0.0
        %v2341 = vmax.f32 %v2281, 0.0
        %v2342 = vmax.f32 %v2284, 0.0
        %v2343 = vmax.f32 %v2289, 0.0
        %v2344 = vmax.f32 %v2292, 0.0
        %v2345 = vmax.f32 %v2297, 0.0
        %v2346 = vmax.f32 %v2300, 0.0
        %v2347 = vmax.f32 %v2305, 0.0
        %v2348 = vmax.f32 %v2308, 0.0
        %v2349 = vmax.f32 %v2313, 0.0
        %v2350 = vmax.f32 %v2316, 0.0
        %v2351 = vld [vmem:[%s5] sm:$0xff]
        %v2352 = vpack.c.bf16 %v2320, %v2319
        %v2353 = vpack.c.bf16 %v2322, %v2321
        %v2354 = vpack.c.bf16 %v2324, %v2323
        %v2355 = vpack.c.bf16 %v2326, %v2325
        %v2356 = vpack.c.bf16 %v2328, %v2327
        %v2357 = vpack.c.bf16 %v2330, %v2329
        %v2358 = vpack.c.bf16 %v2332, %v2331
        %v2359 = vpack.c.bf16 %v2334, %v2333
        %v2360 = vpack.c.bf16 %v2336, %v2335
        %v2361 = vpack.c.bf16 %v2338, %v2337
        %v2362 = vpack.c.bf16 %v2340, %v2339
        %v2363 = vpack.c.bf16 %v2342, %v2341
        %v2364 = vpack.c.bf16 %v2344, %v2343
        %v2365 = vpack.c.bf16 %v2346, %v2345
        %v2366 = vpack.c.bf16 %v2348, %v2347
        %v2367 = vpack.c.bf16 %v2350, %v2349
        %v2368 = vld [vmem:[%s6] sm:$0xff]
        %2370 = vset.pattern.permute.xlu0 0
        %2371 = vperm.xlu0 %2370, %v2368
        %v2372 = vpop.permute.xlu0 %2371
        %v2375 = vunpack.c.l.b16 %v2351
        %v2376 = vunpack.c.h.b16 %v2351
        %v2377 = vpack.c.b16 %v2375, %v2375
        %v2378 = vpack.c.b16 %v2376, %v2376
        %2381 = vmatprep.subr.bf16.mxu0 0
        %2382 = vmatpush1.bf16.msra.mxu0 %v2352
        %2383 = vmatprep.subr.bf16.mxu0 0
        %2384 = vmatpush1.bf16.msra.mxu0 %v2353
        %2385 = vmatprep.subr.bf16.mxu0 0
        %2386 = vmatpush1.bf16.msra.mxu0 %v2354
        %2387 = vmatprep.subr.bf16.mxu0 0
        %2388 = vmatpush1.bf16.msra.mxu0 %v2355
        %2389 = vmatprep.subr.bf16.mxu0 0
        %2390 = vmatpush1.bf16.msra.mxu0 %v2356
        %2391 = vmatprep.subr.bf16.mxu0 0
        %2392 = vmatpush1.bf16.msra.mxu0 %v2357
        %2393 = vmatprep.subr.bf16.mxu0 0
        %2394 = vmatpush1.bf16.msra.mxu0 %v2358
        %2395 = vmatprep.subr.bf16.mxu0 0
        %2396 = vmatpush1.bf16.msra.mxu0 %v2359
        %2397 = vmatprep.subr.bf16.mxu0 0
        %2398 = vmatpush1.bf16.msra.mxu0 %v2360
        %2399 = vmatprep.subr.bf16.mxu0 0
        %2400 = vmatpush1.bf16.msra.mxu0 %v2361
        %2401 = vmatprep.subr.bf16.mxu0 0
        %2402 = vmatpush1.bf16.msra.mxu0 %v2362
        %2403 = vmatprep.subr.bf16.mxu0 0
        %2404 = vmatpush1.bf16.msra.mxu0 %v2363
        %2405 = vmatprep.subr.bf16.mxu0 0
        %2406 = vmatpush1.bf16.msra.mxu0 %v2364
        %2407 = vmatprep.subr.bf16.mxu0 0
        %2408 = vmatpush1.bf16.msra.mxu0 %v2365
        %2409 = vmatprep.subr.bf16.mxu0 0
        %2410 = vmatpush1.bf16.msra.mxu0 %v2366
        %2411 = vmatprep.subr.bf16.mxu0 0
        %2412 = vmatpush1.bf16.msra.mxu0 %v2367
        %2413 = vmatprep.mubr.bf16.mxu0 %v2378
        %2414 = vmatmul.mubr.bf16.gmra.mrb[0].mxu0 %v2377
        %v2415 = vpop.f32.mrb[0].mxu0
        %v2416 = vadd.f32 %v2372, %v2415
        %v2417 = vpop.f32.mrb[0].mxu0
        %v2418 = vpop.f32.mrb[0].mxu0
        %v2419 = vpop.f32.mrb[0].mxu0
        %2420 = vdwg.mxu0
        %v2421 = vxor.u32 %v2416, 2147483648
        %v2422 = vmul.f32 %v2421, 1.442695
        %v2423 = vpow.pop %v2422
        %v2424 = vadd.f32 %v2423, 1.0
        %v2425 = vrcp.pop %v2424
        %v2426 = vmul.f32 1.0, %v2425
        %2427 = vst [vmem:[%s321] sm:$0xff] %v2426
        %s2428 = sand.u32 %s181, 1
        %s2429 = scalar_lea.sflag [#allocation4], %s2428
        %s2430 = sand.u32 %s181, 1
        %s2431 = smul.addr %s2430, 8
        %s2432 = scalar_lea.vmem [#allocation3], %s2431
        // Predicated region
        $region90: #{tpu_custom_call.1} parent=84 // pred_check
          %p2433 = pneg %p191
        $region91: #{tpu_custom_call.1} parent=84 // pred_check_branch
          %2435 = sbr.rel (%p2433) target = $region93
        $region92: #{tpu_custom_call.1} parent=84 // pred_region
          %s2437 = ssub.s32 128, 128
          %2438 = vsyncadd %s2429, %s2437
          %s2439 = smul.addr %s21, 128
          %s2440 = scalar_lea.hbm %s7, %s2439
          %s2442 = sshll.u32 %s2432, 4
          %s2443 = int_to_ptr.vmem [resolvable:$true] %s2442
          %2445 = dma.vmem_to_hbm [thread:$0]  %s2443, 128, %s2440, %s2429
        $region93: #{tpu_custom_call.1} parent=84 // pred_fallthru
          _
      $region85: #{tpu_custom_call.1} parent=5 // pred_fallthru
        _
      %p2446 = scmp.le.s32.totalorder 2, %s16
      // Predicated region
      $region94: #{tpu_custom_call.1} parent=5 // pred_check
        %p2447 = pneg %p2446
      $region95: #{tpu_custom_call.1} parent=5 // pred_check_branch
        %2449 = sbr.rel (%p2447) target = $region97
      $region96: #{tpu_custom_call.1} parent=5 // pred_region
        %s2450 = ssub.s32 %s16, 2
        // Predicated region
        $region98: #{tpu_custom_call.1} parent=96 // pred_check
          %p2451 = pneg %p197
        $region99: #{tpu_custom_call.1} parent=96 // pred_check_branch
          %2453 = sbr.rel (%p2451) target = $region101
        $region100: #{tpu_custom_call.1} parent=96 // pred_region
          %s2454 = sand.u32 %s182, 1
          %s2455 = scalar_lea.sflag [#allocation4], %s2454
          %s2456 = sand.u32 %s182, 1
          %s2457 = smul.addr %s2456, 8
          %s2458 = scalar_lea.vmem [#allocation3], %s2457
          %2459 = dma.done %s2455, 128
        $region101: #{tpu_custom_call.1} parent=96 // pred_fallthru
          _
      $region97: #{tpu_custom_call.1} parent=5 // pred_fallthru
        _
    $region6: #{tpu_custom_call.1} parent=1 // loop_footer
      %s20 = sadd.s32 1, %s16
    $region7: #{tpu_custom_call.1} parent=1 // loop_footer_branch
      %15 = sbr.rel target = $region3
    $region8: #{tpu_custom_call.1} parent=1 // loop_exit
      _
    %2460 = vsyncpa [#allocation4], 1
    %s2461 = scalar_lea.sflag [#allocation4], 1
    %2462 = vsyncpa %s2461, 1

</llo_original>
